<compile_context>
chip_gen: v7x
topology: tpu7x:2x2x1
jax: 0.10.0
libtpu: 0.0.40
codegen_flags: <defaults>
</compile_context>

<pallas_src>
import functools

import jax
import jax.numpy as jnp
from jax.experimental import pallas as pl
from jax.experimental.pallas import tpu as pltpu


def _bottleneck_kernel(x_ref, w1_ref, b1_ref, dw_ref, b2_ref, w3_ref, b3_ref,
                       o_ref, pad_ref, *, stride, add_residual):
    """NB images per grid step of the fused bottleneck.

    x_ref  : (NB, H, W, Cin)          input tile, native Cin (f32)
    w1_ref : (Cin, Cmid_p)            1x1 expand conv, BN1 scale folded (bf16)
    dw_ref : (3, 3, Cmid_p)           depthwise 3x3 conv, BN2 scale folded (f32)
    w3_ref : (Cmid_p, Cout_p)         1x1 project conv, BN3 scale folded (bf16)
    b*_ref : (1, C)                   folded BN biases (f32)
    o_ref  : (NB, Ho, Wo, Cout_p)     output tile
    pad_ref: (NB, H+2, Wp2, Cmid_p)   scratch for padded activations
    """
    NB, H, W, Cin = x_ref.shape
    Cmid = w1_ref.shape[1]          # lane-padded
    Cout = w3_ref.shape[1]          # lane-padded
    _, Ho, Wo, _ = o_ref.shape
    Wp2 = pad_ref.shape[2]          # W + 2 rounded up to 8 sublanes
    act_dt = pad_ref.dtype

    # ---- conv1: 1x1 pointwise on the MXU (bf16 operands, f32 acc) + bias + ReLU6.
    xb = x_ref[...].astype(jnp.bfloat16).reshape(NB * H * W, Cin)
    h = jnp.dot(xb, w1_ref[...], preferred_element_type=jnp.float32)
    h = jnp.clip(h + b1_ref[...], 0.0, 6.0)

    # ---- write h into the padded scratch; zero only the halo/alignment strip
    # (the interior is fully overwritten below).
    pad_ref[:, 0:1, :, :] = jnp.zeros((NB, 1, Wp2, Cmid), act_dt)
    pad_ref[:, H + 1:H + 2, :, :] = jnp.zeros((NB, 1, Wp2, Cmid), act_dt)
    pad_ref[:, :, 0:1, :] = jnp.zeros((NB, H + 2, 1, Cmid), act_dt)
    pad_ref[:, :, W + 1:Wp2, :] = jnp.zeros((NB, H + 2, Wp2 - (W + 1), Cmid), act_dt)
    pad_ref[:, 1:H + 1, 1:W + 1, :] = h.reshape(NB, H, W, Cmid).astype(act_dt)

    # ---- conv2: depthwise 3x3, pad=1, stride=stride, + bias + ReLU6.
    dwv = dw_ref[...]                                  # (3, 3, Cmid) f32
    taps = [
        jax.lax.slice(dwv, (di, dj, 0), (di + 1, dj + 1, Cmid)).reshape(1, 1, 1, Cmid)
        for di in range(3) for dj in range(3)
    ]

    wspan = stride * (Wo - 1) + 1
    hspan = stride * (Ho - 1) + 1
    acc = None
    for dj in range(3):
        # One sublane-offset column slice + one dtype convert per kernel
        # column, read directly from the scratch ref.
        colf = pad_ref[:, :, dj:dj + wspan, :].astype(jnp.float32)
        for di in range(3):
            if stride == 1:
                win = colf[:, di:di + Ho, :, :]        # free address offset
            else:
                win = jax.lax.slice(colf, (0, di, 0, 0),
                                    (NB, di + hspan, wspan, Cmid),
                                    (1, stride, stride, 1))
            contrib = win * taps[di * 3 + dj]
            acc = contrib if acc is None else acc + contrib
    h2 = jnp.clip(acc + b2_ref[...], 0.0, 6.0).astype(jnp.bfloat16)

    # ---- conv3: 1x1 pointwise on the MXU + bias (+ residual).
    out = jnp.dot(h2.reshape(NB * Ho * Wo, Cmid), w3_ref[...],
                  preferred_element_type=jnp.float32)
    out = (out + b3_ref[...]).reshape(NB, Ho, Wo, Cout)

    if add_residual:
        xres = x_ref[...]                              # re-read; f32 residual
        if Cin == Cout:
            o_ref[...] = (out + xres).astype(o_ref.dtype)
        else:
            # x is NOT lane-padded in HBM: add to the first Cin lanes only.
            o_ref[:, :, :, :Cin] = (out[..., :Cin] + xres).astype(o_ref.dtype)
            o_ref[:, :, :, Cin:] = out[..., Cin:].astype(o_ref.dtype)
    else:
        o_ref[...] = out.astype(o_ref.dtype)


def _round_up(x, m):
    return (x + m - 1) // m * m


def _tpu_generation():
    try:
        kind = jax.devices()[0].device_kind.lower()
    except Exception:
        return None
    for gen in ("v7", "v6", "v5"):
        if gen in kind:
            return gen
    return None


def _vmem_capacity_bytes(gen):
    try:
        cap = int(pltpu.get_tpu_info().vmem_capacity_bytes)
        if cap > 0:
            return cap
    except Exception:
        pass
    return 128 * 1024 * 1024 if gen in ("v5", "v6") else 64 * 1024 * 1024


def _per_step_bytes(nb, *, H, W, Ho, Wo, Wp2, Cin, Cmid_p, Cout_p, act_bytes,
                    weight_bytes):
    """Single per-step VMEM estimate used by BOTH the NB chooser and the
    vmem_limit hint (keeps the two consistent)."""
    io = 2 * nb * (H * W * Cin + Ho * Wo * Cout_p) * 4       # dbl-buffered in/out
    pad = nb * (H + 2) * Wp2 * Cmid_p * act_bytes            # persistent scratch
    tmp = nb * H * W * Cmid_p * 4                            # conv1 output (f32)
    tmp += nb * (H + 2) * W * Cmid_p * 4                     # f32 column window
    tmp += nb * Ho * Wo * Cmid_p * (4 + act_bytes)           # dw acc (f32) + h2
    tmp += nb * Ho * Wo * Cout_p * 4                         # conv3 result (f32)
    return io + pad + tmp + weight_bytes


def _choose_batch_block(N, H, W, per_step_fn, budget, num_cores, target_m=1024):
    """Largest divisor of N (capped at N//num_cores so the parallel axis can
    shard across cores) whose per-step footprint fits `budget`, stopping once
    the matmul M-dim reaches target_m."""
    max_nb = N if num_cores <= 1 else max(1, N // num_cores)
    best = 1
    for nb in range(1, max_nb + 1):
        if N % nb:
            continue
        if nb > 1 and per_step_fn(nb) > budget:
            break
        best = nb
        if nb * H * W >= target_m:
            break
    return best


def linear_bottleneck(x_nhwc, params, *, stride=1, lane=128):
    """Fused LinearBottleneck forward.  x_nhwc: (N, H, W, Cin) float32.

    params = (w1 (Cin,Cmid), s1, b1 (1,Cmid), dw (3,3,Cmid), s2, b2 (1,Cmid),
              w3 (Cmid,Cout), s3, b3 (1,Cout))   -- all float32, unpadded.
    """
    w1, s1, b1, dw, s2, b2, w3, s3, b3 = params
    N, H, W, Cin = x_nhwc.shape
    Cmid = w1.shape[1]
    Cout = w3.shape[1]
    Ho = (H + 2 - 3) // stride + 1
    Wo = (W + 2 - 3) // stride + 1
    add_residual = (stride == 1 and Cin == Cout)

    # ---- host-side prep: fold BN scales into weights, pad channels to lanes.
    Cmid_p = _round_up(Cmid, lane)
    Cout_p = _round_up(Cout, lane)
    Wp2 = _round_up(W + 2, 8)            # sublane-aligned padded-scratch width

    s1 = s1.reshape(1, Cmid); b1 = b1.reshape(1, Cmid)
    s2 = s2.reshape(1, Cmid); b2 = b2.reshape(1, Cmid)
    s3 = s3.reshape(1, Cout); b3 = b3.reshape(1, Cout)

    w1p = jnp.zeros((Cin, Cmid_p), jnp.bfloat16).at[:, :Cmid].set(
        (w1 * s1).astype(jnp.bfloat16))
    dwp = jnp.zeros((3, 3, Cmid_p), jnp.float32).at[:, :, :Cmid].set(
        dw * s2.reshape(1, 1, Cmid))
    w3p = jnp.zeros((Cmid_p, Cout_p), jnp.bfloat16).at[:Cmid, :Cout].set(
        (w3 * s3).astype(jnp.bfloat16))
    b1p = jnp.zeros((1, Cmid_p), jnp.float32).at[:, :Cmid].set(b1)
    b2p = jnp.zeros((1, Cmid_p), jnp.float32).at[:, :Cmid].set(b2)
    b3p = jnp.zeros((1, Cout_p), jnp.float32).at[:, :Cout].set(b3)

    # ---- chip-aware knobs.
    gen = _tpu_generation()
    act_dtype = jnp.float32 if gen == "v5" else jnp.bfloat16   # no bf16 VALU on v5e
    act_bytes = 4 if act_dtype == jnp.float32 else 2
    capacity = _vmem_capacity_bytes(gen)
    num_cores = 2 if gen == "v7" else 1                        # shard grid on v7x
    cap_target = min(capacity * 3 // 4, 100 * 1024 * 1024)     # 48 MiB @64, 96 MiB @128
    budget = cap_target * 4 // 5

    weight_bytes = 2 * (w1p.size * 2 + w3p.size * 2 + dwp.size * 4
                        + (b1p.size + b2p.size + b3p.size) * 4)
    per_step_fn = functools.partial(
        _per_step_bytes, H=H, W=W, Ho=Ho, Wo=Wo, Wp2=Wp2, Cin=Cin,
        Cmid_p=Cmid_p, Cout_p=Cout_p, act_bytes=act_bytes,
        weight_bytes=weight_bytes)

    NB = _choose_batch_block(N, H, W, per_step_fn, budget, num_cores)
    grid = (N // NB,)
    step_bytes = per_step_fn(NB)
    vmem_limit = int(min(capacity * 9 // 10,
                         max(32 * 1024 * 1024, step_bytes * 5 // 4)))

    kernel = functools.partial(_bottleneck_kernel, stride=stride,
                               add_residual=add_residual)

    def rep(shape):     # weight / bias blocks revisited at every grid step
        return pl.BlockSpec(shape, lambda b, _n=len(shape): (0,) * _n)

    flops = (2 * N * H * W * Cin * Cmid_p             # conv1
             + 2 * 9 * N * Ho * Wo * Cmid_p           # depthwise 3x3
             + 2 * N * Ho * Wo * Cmid_p * Cout_p)     # conv3
    bytes_accessed = (x_nhwc.size * 4 + N * Ho * Wo * Cout_p * 4
                      + w1p.size * 2 + w3p.size * 2 + dwp.size * 4
                      + (b1p.size + b2p.size + b3p.size) * 4)

    out_p = pl.pallas_call(
        kernel,
        out_shape=jax.ShapeDtypeStruct((N, Ho, Wo, Cout_p), x_nhwc.dtype),
        grid_spec=pltpu.PrefetchScalarGridSpec(
            num_scalar_prefetch=0,
            grid=grid,
            in_specs=[
                pl.BlockSpec((NB, H, W, Cin), lambda b: (b, 0, 0, 0)),
                rep(w1p.shape), rep(b1p.shape),
                rep(dwp.shape), rep(b2p.shape),
                rep(w3p.shape), rep(b3p.shape),
            ],
            out_specs=pl.BlockSpec((NB, Ho, Wo, Cout_p), lambda b: (b, 0, 0, 0)),
            scratch_shapes=[pltpu.VMEM((NB, H + 2, Wp2, Cmid_p), act_dtype)],
        ),
        compiler_params=pltpu.CompilerParams(
            dimension_semantics=("parallel",),
            vmem_limit_bytes=vmem_limit),
        cost_estimate=pl.CostEstimate(
            flops=flops, transcendentals=0, bytes_accessed=bytes_accessed),
    )(x_nhwc, w1p, b1p, dwp, b2p, w3p, b3p)

    return out_p[..., :Cout] if Cout_p != Cout else out_p


def ref_forward(x_nhwc, params, stride):
    """Pure-JAX f32 reference (original math, unfolded BN) for verification."""
    w1, s1, b1, dw, s2, b2, w3, s3, b3 = params
    N, H, W, Cin = x_nhwc.shape
    Cout = w3.shape[1]
    h = jnp.clip(jnp.einsum('nhwc,cd->nhwd', x_nhwc, w1) * s1 + b1, 0.0, 6.0)
    hp = jnp.pad(h, ((0, 0), (1, 1), (1, 1), (0, 0)))
    Ho = (H + 2 - 3) // stride + 1
    Wo = (W + 2 - 3) // stride + 1
    acc = jnp.zeros((N, Ho, Wo, h.shape[-1]), jnp.float32)
    for di in range(3):
        for dj in range(3):
            win = hp[:, di:di + stride * (Ho - 1) + 1:stride,
                     dj:dj + stride * (Wo - 1) + 1:stride, :]
            acc = acc + win * dw[di, dj]
    h2 = jnp.clip(acc * s2 + b2, 0.0, 6.0)
    out = jnp.einsum('nhwc,cd->nhwd', h2, w3) * s3 + b3
    if stride == 1 and Cin == Cout:
        out = out + x_nhwc
    return out


if __name__ == "__main__":
    key = jax.random.PRNGKey(0)

    def make_params(k, inplanes, outplanes, t):
        Cmid = inplanes * t
        k1, k2, k3 = jax.random.split(k, 3)
        w1 = jax.random.normal(k1, (inplanes, Cmid), jnp.float32) * 0.1
        dw = jax.random.normal(k2, (3, 3, Cmid), jnp.float32) * 0.1
        w3 = jax.random.normal(k3, (Cmid, outplanes), jnp.float32) * 0.1

        def bn_fold(c, lo, hi):
            gamma = jnp.linspace(0.5, 1.5, c, dtype=jnp.float32)
            beta = jnp.linspace(lo, hi, c, dtype=jnp.float32)
            mean = jnp.linspace(-0.05, 0.05, c, dtype=jnp.float32)
            var = jnp.linspace(0.9, 1.1, c, dtype=jnp.float32)
            eps = 1e-5
            scale = gamma / jnp.sqrt(var + eps)
            bias = beta - mean * scale
            return scale.reshape(1, c), bias.reshape(1, c)

        s1, b1 = bn_fold(Cmid, -0.1, 0.1)
        s2, b2 = bn_fold(Cmid, -0.2, 0.2)
        s3, b3 = bn_fold(outplanes, -0.1, 0.1)
        return (w1, s1, b1, dw, s2, b2, w3, s3, b3)

    # Small shapes consistent with the module: N divisible by num_segments=3,
    # inplanes divisible by 4 (tsm channel split), t=6 default.
    N, H, W, t = 3, 8, 8, 6
    cases = [
        dict(inplanes=8, outplanes=8, stride=1),    # residual path
        dict(inplanes=8, outplanes=16, stride=1),   # no residual, Cout padded
    ]
    for i, case in enumerate(cases):
        kp, kx, key = jax.random.split(key, 3)
        params = make_params(kp, case["inplanes"], case["outplanes"], t)
        x = jax.random.normal(kx, (N, H, W, case["inplanes"]), jnp.float32)

        out = linear_bottleneck(x, params, stride=case["stride"])
        out = jax.block_until_ready(out)

        ref = ref_forward(x, params, case["stride"])
        Ho = (H + 2 - 3) // case["stride"] + 1
        Wo = (W + 2 - 3) // case["stride"] + 1
        assert out.shape == (N, Ho, Wo, case["outplanes"]), (i, out.shape)
        max_err = float(jnp.max(jnp.abs(out - ref)))
        # bf16 matmul operands / bf16 activation storage => ~1e-2 agreement
        # against the pure-f32 reference.
        assert jnp.allclose(out, ref, atol=3e-2, rtol=3e-2), (i, max_err)

    print("KERNEL_OK")
</pallas_src>

<mosaic_0001>
module attributes {stable_mosaic.version = 11 : i64} {
  func.func @_bottleneck_kernel(%arg0: i32, %arg1: memref<3x8x8x8xf32, #tpu.memory_space<vmem>>, %arg2: memref<8x128xbf16, #tpu.memory_space<vmem>>, %arg3: memref<1x128xf32, #tpu.memory_space<vmem>>, %arg4: memref<3x3x128xf32, #tpu.memory_space<vmem>>, %arg5: memref<1x128xf32, #tpu.memory_space<vmem>>, %arg6: memref<128x128xbf16, #tpu.memory_space<vmem>>, %arg7: memref<1x128xf32, #tpu.memory_space<vmem>>, %arg8: memref<3x8x8x128xf32, #tpu.memory_space<vmem>>, %arg9: memref<3x10x16x128xbf16, #tpu.memory_space<vmem>>) attributes {dimension_semantics = [#tpu.dimension_semantics<parallel>], iteration_bounds = array<i64: 1>, scalar_prefetch = 0 : i64, scratch_operands = 1 : i64, tpu.core_type = #tpu.core_type<tc>, window_params = [{transform_indices = @transform_0, window_bounds = array<i64: 3, 8, 8, 8>}, {pipeline_mode = #tpu.pipeline_mode<synchronous>, transform_indices = @transform_1, window_bounds = array<i64: 8, 128>}, {pipeline_mode = #tpu.pipeline_mode<synchronous>, transform_indices = @transform_2, window_bounds = array<i64: 1, 128>}, {pipeline_mode = #tpu.pipeline_mode<synchronous>, transform_indices = @transform_3, window_bounds = array<i64: 3, 3, 128>}, {pipeline_mode = #tpu.pipeline_mode<synchronous>, transform_indices = @transform_4, window_bounds = array<i64: 1, 128>}, {pipeline_mode = #tpu.pipeline_mode<synchronous>, transform_indices = @transform_5, window_bounds = array<i64: 128, 128>}, {pipeline_mode = #tpu.pipeline_mode<synchronous>, transform_indices = @transform_6, window_bounds = array<i64: 1, 128>}, {transform_indices = @transform_7, window_bounds = array<i64: 3, 8, 8, 128>}]} {
    %c0 = arith.constant 0 : index
    %c0_0 = arith.constant 0 : index
    %c0_1 = arith.constant 0 : index
    %c0_2 = arith.constant 0 : index
    %0 = vector.load %arg1[%c0, %c0_0, %c0_1, %c0_2] : memref<3x8x8x8xf32, #tpu.memory_space<vmem>>, vector<3x8x8x8xf32>
    %1 = arith.truncf %0 : vector<3x8x8x8xf32> to vector<3x8x8x8xbf16>
    %2 = vector.shape_cast %1 : vector<3x8x8x8xbf16> to vector<192x8xbf16>
    %c0_3 = arith.constant 0 : index
    %c0_4 = arith.constant 0 : index
    %3 = vector.load %arg2[%c0_3, %c0_4] : memref<8x128xbf16, #tpu.memory_space<vmem>>, vector<8x128xbf16>
    %cst = arith.constant dense<0.000000e+00> : vector<192x128xf32>
    %4 = tpu.matmul %2, %3, %cst {dimension_numbers = #tpu.dot_dimension_numbers<[1], [0], [0], [1], [0, 0, 1, 1], [], []>} : vector<192x8xbf16>, vector<8x128xbf16>, vector<192x128xf32> -> vector<192x128xf32>
    %c0_5 = arith.constant 0 : index
    %c0_6 = arith.constant 0 : index
    %5 = vector.load %arg3[%c0_5, %c0_6] : memref<1x128xf32, #tpu.memory_space<vmem>>, vector<1x128xf32>
    %6 = vector.broadcast %5 : vector<1x128xf32> to vector<192x128xf32>
    %7 = arith.addf %4, %6 : vector<192x128xf32>
    %cst_7 = arith.constant 0.000000e+00 : f32
    %cst_8 = arith.constant 6.000000e+00 : f32
    %8 = vector.broadcast %cst_7 : f32 to vector<192x128xf32>
    %9 = arith.maximumf %8, %7 : vector<192x128xf32>
    %10 = vector.broadcast %cst_8 : f32 to vector<192x128xf32>
    %11 = arith.minimumf %10, %9 : vector<192x128xf32>
    %cst_9 = arith.constant 0.000000e+00 : bf16
    %12 = vector.broadcast %cst_9 : bf16 to vector<3x1x16x128xbf16>
    %c0_10 = arith.constant 0 : index
    %c0_11 = arith.constant 0 : index
    %c0_12 = arith.constant 0 : index
    %c0_13 = arith.constant 0 : index
    %13 = vector.load %arg9[%c0_10, %c0_11, %c0_12, %c0_13] : memref<3x10x16x128xbf16, #tpu.memory_space<vmem>>, vector<3x1x16x128xbf16>
    tpu.vector_store %arg9[%c0_10, %c0_11, %c0_12, %c0_13], %12 {strides = array<i32>} : memref<3x10x16x128xbf16, #tpu.memory_space<vmem>>, vector<3x1x16x128xbf16>,
    %cst_14 = arith.constant 0.000000e+00 : bf16
    %14 = vector.broadcast %cst_14 : bf16 to vector<3x1x16x128xbf16>
    %c0_15 = arith.constant 0 : index
    %c9 = arith.constant 9 : index
    %c0_16 = arith.constant 0 : index
    %c0_17 = arith.constant 0 : index
    %15 = vector.load %arg9[%c0_15, %c9, %c0_16, %c0_17] : memref<3x10x16x128xbf16, #tpu.memory_space<vmem>>, vector<3x1x16x128xbf16>
    tpu.vector_store %arg9[%c0_15, %c9, %c0_16, %c0_17], %14 {strides = array<i32>} : memref<3x10x16x128xbf16, #tpu.memory_space<vmem>>, vector<3x1x16x128xbf16>,
    %cst_18 = arith.constant 0.000000e+00 : bf16
    %16 = vector.broadcast %cst_18 : bf16 to vector<3x10x1x128xbf16>
    %c0_19 = arith.constant 0 : index
    %c0_20 = arith.constant 0 : index
    %c0_21 = arith.constant 0 : index
    %c0_22 = arith.constant 0 : index
    %17 = vector.load %arg9[%c0_19, %c0_20, %c0_21, %c0_22] : memref<3x10x16x128xbf16, #tpu.memory_space<vmem>>, vector<3x10x1x128xbf16>
    tpu.vector_store %arg9[%c0_19, %c0_20, %c0_21, %c0_22], %16 {strides = array<i32>} : memref<3x10x16x128xbf16, #tpu.memory_space<vmem>>, vector<3x10x1x128xbf16>,
    %cst_23 = arith.constant 0.000000e+00 : bf16
    %18 = vector.broadcast %cst_23 : bf16 to vector<3x10x7x128xbf16>
    %c0_24 = arith.constant 0 : index
    %c0_25 = arith.constant 0 : index
    %c9_26 = arith.constant 9 : index
    %c0_27 = arith.constant 0 : index
    %19 = vector.load %arg9[%c0_24, %c0_25, %c9_26, %c0_27] : memref<3x10x16x128xbf16, #tpu.memory_space<vmem>>, vector<3x10x7x128xbf16>
    tpu.vector_store %arg9[%c0_24, %c0_25, %c9_26, %c0_27], %18 {strides = array<i32>} : memref<3x10x16x128xbf16, #tpu.memory_space<vmem>>, vector<3x10x7x128xbf16>,
    %20 = vector.shape_cast %11 : vector<192x128xf32> to vector<3x8x8x128xf32>
    %21 = arith.truncf %20 : vector<3x8x8x128xf32> to vector<3x8x8x128xbf16>
    %c0_28 = arith.constant 0 : index
    %c1 = arith.constant 1 : index
    %c1_29 = arith.constant 1 : index
    %c0_30 = arith.constant 0 : index
    %22 = vector.load %arg9[%c0_28, %c1, %c1_29, %c0_30] : memref<3x10x16x128xbf16, #tpu.memory_space<vmem>>, vector<3x8x8x128xbf16>
    tpu.vector_store %arg9[%c0_28, %c1, %c1_29, %c0_30], %21 {strides = array<i32>} : memref<3x10x16x128xbf16, #tpu.memory_space<vmem>>, vector<3x8x8x128xbf16>,
    %c0_31 = arith.constant 0 : index
    %c0_32 = arith.constant 0 : index
    %c0_33 = arith.constant 0 : index
    %23 = vector.load %arg4[%c0_31, %c0_32, %c0_33] : memref<3x3x128xf32, #tpu.memory_space<vmem>>, vector<3x3x128xf32>
    %24 = vector.extract_strided_slice %23 {offsets = [0, 0, 0], sizes = [1, 1, 128], strides = [1, 1, 1]} : vector<3x3x128xf32> to vector<1x1x128xf32>
    %25 = vector.shape_cast %24 : vector<1x1x128xf32> to vector<1x1x1x128xf32>
    %26 = vector.extract_strided_slice %23 {offsets = [0, 1, 0], sizes = [1, 1, 128], strides = [1, 1, 1]} : vector<3x3x128xf32> to vector<1x1x128xf32>
    %27 = vector.shape_cast %26 : vector<1x1x128xf32> to vector<1x1x1x128xf32>
    %28 = vector.extract_strided_slice %23 {offsets = [0, 2, 0], sizes = [1, 1, 128], strides = [1, 1, 1]} : vector<3x3x128xf32> to vector<1x1x128xf32>
    %29 = vector.shape_cast %28 : vector<1x1x128xf32> to vector<1x1x1x128xf32>
    %30 = vector.extract_strided_slice %23 {offsets = [1, 0, 0], sizes = [1, 1, 128], strides = [1, 1, 1]} : vector<3x3x128xf32> to vector<1x1x128xf32>
    %31 = vector.shape_cast %30 : vector<1x1x128xf32> to vector<1x1x1x128xf32>
    %32 = vector.extract_strided_slice %23 {offsets = [1, 1, 0], sizes = [1, 1, 128], strides = [1, 1, 1]} : vector<3x3x128xf32> to vector<1x1x128xf32>
    %33 = vector.shape_cast %32 : vector<1x1x128xf32> to vector<1x1x1x128xf32>
    %34 = vector.extract_strided_slice %23 {offsets = [1, 2, 0], sizes = [1, 1, 128], strides = [1, 1, 1]} : vector<3x3x128xf32> to vector<1x1x128xf32>
    %35 = vector.shape_cast %34 : vector<1x1x128xf32> to vector<1x1x1x128xf32>
    %36 = vector.extract_strided_slice %23 {offsets = [2, 0, 0], sizes = [1, 1, 128], strides = [1, 1, 1]} : vector<3x3x128xf32> to vector<1x1x128xf32>
    %37 = vector.shape_cast %36 : vector<1x1x128xf32> to vector<1x1x1x128xf32>
    %38 = vector.extract_strided_slice %23 {offsets = [2, 1, 0], sizes = [1, 1, 128], strides = [1, 1, 1]} : vector<3x3x128xf32> to vector<1x1x128xf32>
    %39 = vector.shape_cast %38 : vector<1x1x128xf32> to vector<1x1x1x128xf32>
    %40 = vector.extract_strided_slice %23 {offsets = [2, 2, 0], sizes = [1, 1, 128], strides = [1, 1, 1]} : vector<3x3x128xf32> to vector<1x1x128xf32>
    %41 = vector.shape_cast %40 : vector<1x1x128xf32> to vector<1x1x1x128xf32>
    %c0_34 = arith.constant 0 : index
    %c0_35 = arith.constant 0 : index
    %c0_36 = arith.constant 0 : index
    %c0_37 = arith.constant 0 : index
    %42 = vector.load %arg9[%c0_34, %c0_35, %c0_36, %c0_37] : memref<3x10x16x128xbf16, #tpu.memory_space<vmem>>, vector<3x10x8x128xbf16>
    %43 = arith.extf %42 : vector<3x10x8x128xbf16> to vector<3x10x8x128xf32>
    %44 = vector.extract_strided_slice %43 {offsets = [0, 0, 0, 0], sizes = [3, 8, 8, 128], strides = [1, 1, 1, 1]} : vector<3x10x8x128xf32> to vector<3x8x8x128xf32>
    %45 = vector.broadcast %25 : vector<1x1x1x128xf32> to vector<3x8x8x128xf32>
    %46 = arith.mulf %44, %45 : vector<3x8x8x128xf32>
    %47 = vector.extract_strided_slice %43 {offsets = [0, 1, 0, 0], sizes = [3, 8, 8, 128], strides = [1, 1, 1, 1]} : vector<3x10x8x128xf32> to vector<3x8x8x128xf32>
    %48 = vector.broadcast %31 : vector<1x1x1x128xf32> to vector<3x8x8x128xf32>
    %49 = arith.mulf %47, %48 : vector<3x8x8x128xf32>
    %50 = arith.addf %46, %49 : vector<3x8x8x128xf32>
    %51 = vector.extract_strided_slice %43 {offsets = [0, 2, 0, 0], sizes = [3, 8, 8, 128], strides = [1, 1, 1, 1]} : vector<3x10x8x128xf32> to vector<3x8x8x128xf32>
    %52 = vector.broadcast %37 : vector<1x1x1x128xf32> to vector<3x8x8x128xf32>
    %53 = arith.mulf %51, %52 : vector<3x8x8x128xf32>
    %54 = arith.addf %50, %53 : vector<3x8x8x128xf32>
    %c0_38 = arith.constant 0 : index
    %c0_39 = arith.constant 0 : index
    %c1_40 = arith.constant 1 : index
    %c0_41 = arith.constant 0 : index
    %55 = vector.load %arg9[%c0_38, %c0_39, %c1_40, %c0_41] : memref<3x10x16x128xbf16, #tpu.memory_space<vmem>>, vector<3x10x8x128xbf16>
    %56 = arith.extf %55 : vector<3x10x8x128xbf16> to vector<3x10x8x128xf32>
    %57 = vector.extract_strided_slice %56 {offsets = [0, 0, 0, 0], sizes = [3, 8, 8, 128], strides = [1, 1, 1, 1]} : vector<3x10x8x128xf32> to vector<3x8x8x128xf32>
    %58 = vector.broadcast %27 : vector<1x1x1x128xf32> to vector<3x8x8x128xf32>
    %59 = arith.mulf %57, %58 : vector<3x8x8x128xf32>
    %60 = arith.addf %54, %59 : vector<3x8x8x128xf32>
    %61 = vector.extract_strided_slice %56 {offsets = [0, 1, 0, 0], sizes = [3, 8, 8, 128], strides = [1, 1, 1, 1]} : vector<3x10x8x128xf32> to vector<3x8x8x128xf32>
    %62 = vector.broadcast %33 : vector<1x1x1x128xf32> to vector<3x8x8x128xf32>
    %63 = arith.mulf %61, %62 : vector<3x8x8x128xf32>
    %64 = arith.addf %60, %63 : vector<3x8x8x128xf32>
    %65 = vector.extract_strided_slice %56 {offsets = [0, 2, 0, 0], sizes = [3, 8, 8, 128], strides = [1, 1, 1, 1]} : vector<3x10x8x128xf32> to vector<3x8x8x128xf32>
    %66 = vector.broadcast %39 : vector<1x1x1x128xf32> to vector<3x8x8x128xf32>
    %67 = arith.mulf %65, %66 : vector<3x8x8x128xf32>
    %68 = arith.addf %64, %67 : vector<3x8x8x128xf32>
    %c0_42 = arith.constant 0 : index
    %c0_43 = arith.constant 0 : index
    %c2 = arith.constant 2 : index
    %c0_44 = arith.constant 0 : index
    %69 = vector.load %arg9[%c0_42, %c0_43, %c2, %c0_44] : memref<3x10x16x128xbf16, #tpu.memory_space<vmem>>, vector<3x10x8x128xbf16>
    %70 = arith.extf %69 : vector<3x10x8x128xbf16> to vector<3x10x8x128xf32>
    %71 = vector.extract_strided_slice %70 {offsets = [0, 0, 0, 0], sizes = [3, 8, 8, 128], strides = [1, 1, 1, 1]} : vector<3x10x8x128xf32> to vector<3x8x8x128xf32>
    %72 = vector.broadcast %29 : vector<1x1x1x128xf32> to vector<3x8x8x128xf32>
    %73 = arith.mulf %71, %72 : vector<3x8x8x128xf32>
    %74 = arith.addf %68, %73 : vector<3x8x8x128xf32>
    %75 = vector.extract_strided_slice %70 {offsets = [0, 1, 0, 0], sizes = [3, 8, 8, 128], strides = [1, 1, 1, 1]} : vector<3x10x8x128xf32> to vector<3x8x8x128xf32>
    %76 = vector.broadcast %35 : vector<1x1x1x128xf32> to vector<3x8x8x128xf32>
    %77 = arith.mulf %75, %76 : vector<3x8x8x128xf32>
    %78 = arith.addf %74, %77 : vector<3x8x8x128xf32>
    %79 = vector.extract_strided_slice %70 {offsets = [0, 2, 0, 0], sizes = [3, 8, 8, 128], strides = [1, 1, 1, 1]} : vector<3x10x8x128xf32> to vector<3x8x8x128xf32>
    %80 = vector.broadcast %41 : vector<1x1x1x128xf32> to vector<3x8x8x128xf32>
    %81 = arith.mulf %79, %80 : vector<3x8x8x128xf32>
    %82 = arith.addf %78, %81 : vector<3x8x8x128xf32>
    %c0_45 = arith.constant 0 : index
    %c0_46 = arith.constant 0 : index
    %83 = vector.load %arg5[%c0_45, %c0_46] : memref<1x128xf32, #tpu.memory_space<vmem>>, vector<1x128xf32>
    %84 = vector.shape_cast %83 : vector<1x128xf32> to vector<1x1x1x128xf32>
    %85 = vector.broadcast %84 : vector<1x1x1x128xf32> to vector<3x8x8x128xf32>
    %86 = arith.addf %82, %85 : vector<3x8x8x128xf32>
    %cst_47 = arith.constant 0.000000e+00 : f32
    %cst_48 = arith.constant 6.000000e+00 : f32
    %87 = vector.broadcast %cst_47 : f32 to vector<3x8x8x128xf32>
    %88 = arith.maximumf %87, %86 : vector<3x8x8x128xf32>
    %89 = vector.broadcast %cst_48 : f32 to vector<3x8x8x128xf32>
    %90 = arith.minimumf %89, %88 : vector<3x8x8x128xf32>
    %91 = arith.truncf %90 : vector<3x8x8x128xf32> to vector<3x8x8x128xbf16>
    %92 = vector.shape_cast %91 : vector<3x8x8x128xbf16> to vector<192x128xbf16>
    %c0_49 = arith.constant 0 : index
    %c0_50 = arith.constant 0 : index
    %93 = vector.load %arg6[%c0_49, %c0_50] : memref<128x128xbf16, #tpu.memory_space<vmem>>, vector<128x128xbf16>
    %cst_51 = arith.constant dense<0.000000e+00> : vector<192x128xf32>
    %94 = tpu.matmul %92, %93, %cst_51 {dimension_numbers = #tpu.dot_dimension_numbers<[1], [0], [0], [1], [0, 0, 1, 1], [], []>} : vector<192x128xbf16>, vector<128x128xbf16>, vector<192x128xf32> -> vector<192x128xf32>
    %c0_52 = arith.constant 0 : index
    %c0_53 = arith.constant 0 : index
    %95 = vector.load %arg7[%c0_52, %c0_53] : memref<1x128xf32, #tpu.memory_space<vmem>>, vector<1x128xf32>
    %96 = vector.broadcast %95 : vector<1x128xf32> to vector<192x128xf32>
    %97 = arith.addf %94, %96 : vector<192x128xf32>
    %98 = vector.shape_cast %97 : vector<192x128xf32> to vector<3x8x8x128xf32>
    %c0_54 = arith.constant 0 : index
    %c0_55 = arith.constant 0 : index
    %c0_56 = arith.constant 0 : index
    %c0_57 = arith.constant 0 : index
    %99 = vector.load %arg1[%c0_54, %c0_55, %c0_56, %c0_57] : memref<3x8x8x8xf32, #tpu.memory_space<vmem>>, vector<3x8x8x8xf32>
    %100 = vector.extract_strided_slice %98 {offsets = [0, 0, 0, 0], sizes = [3, 8, 8, 8], strides = [1, 1, 1, 1]} : vector<3x8x8x128xf32> to vector<3x8x8x8xf32>
    %101 = arith.addf %100, %99 : vector<3x8x8x8xf32>
    %c0_58 = arith.constant 0 : index
    %c0_59 = arith.constant 0 : index
    %c0_60 = arith.constant 0 : index
    %c0_61 = arith.constant 0 : index
    %102 = vector.load %arg8[%c0_58, %c0_59, %c0_60, %c0_61] : memref<3x8x8x128xf32, #tpu.memory_space<vmem>>, vector<3x8x8x8xf32>
    tpu.vector_store %arg8[%c0_58, %c0_59, %c0_60, %c0_61], %101 {strides = array<i32>} : memref<3x8x8x128xf32, #tpu.memory_space<vmem>>, vector<3x8x8x8xf32>,
    %103 = vector.extract_strided_slice %98 {offsets = [0, 0, 0, 8], sizes = [3, 8, 8, 120], strides = [1, 1, 1, 1]} : vector<3x8x8x128xf32> to vector<3x8x8x120xf32>
    %c0_62 = arith.constant 0 : index
    %c0_63 = arith.constant 0 : index
    %c0_64 = arith.constant 0 : index
    %c8 = arith.constant 8 : index
    %104 = vector.load %arg8[%c0_62, %c0_63, %c0_64, %c8] : memref<3x8x8x128xf32, #tpu.memory_space<vmem>>, vector<3x8x8x120xf32>
    tpu.vector_store %arg8[%c0_62, %c0_63, %c0_64, %c8], %103 {strides = array<i32>} : memref<3x8x8x128xf32, #tpu.memory_space<vmem>>, vector<3x8x8x120xf32>,
    return
  }
  func.func @transform_0(%arg0: i32) -> (i32, i32, i32, i32) {
    %c0_i32 = arith.constant 0 : i32
    %c0_i32_0 = arith.constant 0 : i32
    %c0_i32_1 = arith.constant 0 : i32
    %c0_i32_2 = arith.constant 0 : i32
    return %arg0, %c0_i32, %c0_i32_0, %c0_i32_1 : i32, i32, i32, i32
  }
  func.func @transform_1(%arg0: i32) -> (i32, i32) {
    %c0_i32 = arith.constant 0 : i32
    %c0_i32_0 = arith.constant 0 : i32
    %c0_i32_1 = arith.constant 0 : i32
    return %c0_i32, %c0_i32_0 : i32, i32
  }
  func.func @transform_2(%arg0: i32) -> (i32, i32) {
    %c0_i32 = arith.constant 0 : i32
    %c0_i32_0 = arith.constant 0 : i32
    %c0_i32_1 = arith.constant 0 : i32
    return %c0_i32, %c0_i32_0 : i32, i32
  }
  func.func @transform_3(%arg0: i32) -> (i32, i32, i32) {
    %c0_i32 = arith.constant 0 : i32
    %c0_i32_0 = arith.constant 0 : i32
    %c0_i32_1 = arith.constant 0 : i32
    %c0_i32_2 = arith.constant 0 : i32
    return %c0_i32, %c0_i32_0, %c0_i32_1 : i32, i32, i32
  }
  func.func @transform_4(%arg0: i32) -> (i32, i32) {
    %c0_i32 = arith.constant 0 : i32
    %c0_i32_0 = arith.constant 0 : i32
    %c0_i32_1 = arith.constant 0 : i32
    return %c0_i32, %c0_i32_0 : i32, i32
  }
  func.func @transform_5(%arg0: i32) -> (i32, i32) {
    %c0_i32 = arith.constant 0 : i32
    %c0_i32_0 = arith.constant 0 : i32
    %c0_i32_1 = arith.constant 0 : i32
    return %c0_i32, %c0_i32_0 : i32, i32
  }
  func.func @transform_6(%arg0: i32) -> (i32, i32) {
    %c0_i32 = arith.constant 0 : i32
    %c0_i32_0 = arith.constant 0 : i32
    %c0_i32_1 = arith.constant 0 : i32
    return %c0_i32, %c0_i32_0 : i32, i32
  }
  func.func @transform_7(%arg0: i32) -> (i32, i32, i32, i32) {
    %c0_i32 = arith.constant 0 : i32
    %c0_i32_0 = arith.constant 0 : i32
    %c0_i32_1 = arith.constant 0 : i32
    %c0_i32_2 = arith.constant 0 : i32
    return %arg0, %c0_i32, %c0_i32_0, %c0_i32_1 : i32, i32, i32, i32
  }
}

</mosaic_0001>

<llo_original>
// kernel: tpu_custom_call.1
$region0: #{tpu_custom_call.1}
  #allocation0 [shape = 'u32[]', space=smem, size = 0x4, offset = 0x4, fixed_abs, tag = 'smem constant byte address 0x4 - core index']
  #allocation1 [shape = 'u32[144,128]{1,0:T(1,128)}', space=vmem, size = 0x12000, scoped, tag = 'internal scratch']
  #allocation2 [shape = 'bf16[3,10,16,128]{3,2,1,0:T(16,128)(2,1)}', space=vmem, size = 0x1e000, scoped, tag = 'scratch operand']
  %s0 = inlined_call_operand.hbm [shape: f32[3,8,8,8], index: 0, kind: input, shape index: {}]
  %s1 = inlined_call_operand.hbm [shape: bf16[8,128], index: 1, kind: input, shape index: {}]
  %s2 = inlined_call_operand.vmem [shape: f32[1,128], index: 2, kind: input, shape index: {}]
  %s3 = inlined_call_operand.hbm [shape: f32[3,3,128], index: 3, kind: input, shape index: {}]
  %s4 = inlined_call_operand.vmem [shape: f32[1,128], index: 4, kind: input, shape index: {}]
  %s5 = inlined_call_operand.hbm [shape: bf16[128,128], index: 5, kind: input, shape index: {}]
  %s6 = inlined_call_operand.vmem [shape: f32[1,128], index: 6, kind: input, shape index: {}]
  %s7 = inlined_call_operand.hbm [shape: f32[3,8,8,128], index: 7, kind: output, shape index: {}]
  %s8 = sld [smem:[#allocation0]]
  $region54: #{tpu_custom_call.1} parent=0
    _
  %s10 = ssub.s32 1, %s8
  %s11 = scalar_select 0, %s10, %s8
  $region1: #{tpu_custom_call.1} parent=0
    #allocation3 [shape = 'u8[98304]{0}', space=vmem, size = 0x18000, scoped, tag = 'input window, operand 0, single buffered']
    #allocation4 [shape = 's32[1]{0}', space=sflag, size = 0x4, scoped, tag = 'scoped memory for tpu_custom_call.1']
    #allocation5 [shape = 's32[1]{0}', space=sflag, size = 0x4, scoped, tag = 'scoped memory for tpu_custom_call.1']
    #allocation6 [shape = 'u8[2048]{0}', space=vmem, size = 0x800, scoped, tag = 'input window, operand 1, single buffered']
    #allocation7 [shape = 's32[1]{0}', space=sflag, size = 0x4, scoped, tag = 'scoped memory for tpu_custom_call.1']
    #allocation8 [shape = 'u8[6144]{0}', space=vmem, size = 0x1800, scoped, tag = 'input window, operand 3, single buffered']
    #allocation9 [shape = 'u8[32768]{0}', space=vmem, size = 0x8000, scoped, tag = 'input window, operand 5, single buffered']
    #allocation10 [shape = 's32[1]{0}', space=sflag, size = 0x4, scoped, tag = 'scoped memory for tpu_custom_call.1']
    #allocation11 [shape = 'u8[98304]{0}', space=vmem, size = 0x18000, scoped, tag = 'output window, operand 0, single buffered']
    %12 = vsyncpa [#allocation4], 0
    %13 = vsyncpa [#allocation7], 0
    %14 = vsyncpa [#allocation10], 0
    %15 = vsyncpa [#allocation5], 0
    // Predicated region
    $region2: #{tpu_custom_call.1} parent=1 // pred_check
      _
    $region3: #{tpu_custom_call.1} parent=1 // pred_check_branch
      %17 = sbr.rel (0) target = $region5
    $region4: #{tpu_custom_call.1} parent=1 // pred_region
      %s19 = ssub.s32 3072, 3072
      %20 = vsyncadd [#allocation4], %s19
      %s21 = sshll.u32 [#allocation3], 4
      %s22 = int_to_ptr.vmem [resolvable:$true] %s21
      %27 = dma.hbm_to_vmem [thread:$0]  %s0, 3072, %s22, [#allocation4], 128, 128, 8
    $region5: #{tpu_custom_call.1} parent=1 // pred_fallthru
      _
    // Predicated region
    $region6: #{tpu_custom_call.1} parent=1 // pred_check
      _
    $region7: #{tpu_custom_call.1} parent=1 // pred_check_branch
      %29 = sbr.rel (0) target = $region9
    $region8: #{tpu_custom_call.1} parent=1 // pred_region
      %s31 = ssub.s32 64, 64
      %32 = vsyncadd [#allocation7], %s31
      %s34 = sshll.u32 [#allocation6], 4
      %s35 = int_to_ptr.vmem [resolvable:$true] %s34
      %37 = dma.hbm_to_vmem [thread:$0]  %s1, 64, %s35, [#allocation7]
    $region9: #{tpu_custom_call.1} parent=1 // pred_fallthru
      _
    // Predicated region
    $region10: #{tpu_custom_call.1} parent=1 // pred_check
      _
    $region11: #{tpu_custom_call.1} parent=1 // pred_check_branch
      %39 = sbr.rel (0) target = $region13
    $region12: #{tpu_custom_call.1} parent=1 // pred_region
      _
    $region13: #{tpu_custom_call.1} parent=1 // pred_fallthru
      _
    // Predicated region
    $region14: #{tpu_custom_call.1} parent=1 // pred_check
      _
    $region15: #{tpu_custom_call.1} parent=1 // pred_check_branch
      %41 = sbr.rel (0) target = $region17
    $region16: #{tpu_custom_call.1} parent=1 // pred_region
      %s43 = ssub.s32 192, 192
      %44 = vsyncadd [#allocation7], %s43
      %s45 = sshll.u32 [#allocation8], 4
      %s46 = int_to_ptr.vmem [resolvable:$true] %s45
      %51 = dma.hbm_to_vmem [thread:$0]  %s3, 192, %s46, [#allocation7], 64, 64, 4
    $region17: #{tpu_custom_call.1} parent=1 // pred_fallthru
      _
    // Predicated region
    $region18: #{tpu_custom_call.1} parent=1 // pred_check
      _
    $region19: #{tpu_custom_call.1} parent=1 // pred_check_branch
      %53 = sbr.rel (0) target = $region21
    $region20: #{tpu_custom_call.1} parent=1 // pred_region
      _
    $region21: #{tpu_custom_call.1} parent=1 // pred_fallthru
      _
    // Predicated region
    $region22: #{tpu_custom_call.1} parent=1 // pred_check
      _
    $region23: #{tpu_custom_call.1} parent=1 // pred_check_branch
      %55 = sbr.rel (0) target = $region25
    $region24: #{tpu_custom_call.1} parent=1 // pred_region
      %s57 = ssub.s32 1024, 1024
      %58 = vsyncadd [#allocation10], %s57
      %s59 = sshll.u32 [#allocation9], 4
      %s60 = int_to_ptr.vmem [resolvable:$true] %s59
      %65 = dma.hbm_to_vmem [thread:$0]  %s5, 1024, %s60, [#allocation10], 64, 64, 4
    $region25: #{tpu_custom_call.1} parent=1 // pred_fallthru
      _
    // Predicated region
    $region26: #{tpu_custom_call.1} parent=1 // pred_check
      _
    $region27: #{tpu_custom_call.1} parent=1 // pred_check_branch
      %67 = sbr.rel (0) target = $region29
    $region28: #{tpu_custom_call.1} parent=1 // pred_region
      _
    $region29: #{tpu_custom_call.1} parent=1 // pred_fallthru
      _
    // Predicated region
    $region30: #{tpu_custom_call.1} parent=1 // pred_check
      _
    $region31: #{tpu_custom_call.1} parent=1 // pred_check_branch
      %69 = sbr.rel (0) target = $region33
    $region32: #{tpu_custom_call.1} parent=1 // pred_region
      %70 = dma.done [#allocation4], 3072
    $region33: #{tpu_custom_call.1} parent=1 // pred_fallthru
      _
    // Predicated region
    $region34: #{tpu_custom_call.1} parent=1 // pred_check
      _
    $region35: #{tpu_custom_call.1} parent=1 // pred_check_branch
      %72 = sbr.rel (0) target = $region37
    $region36: #{tpu_custom_call.1} parent=1 // pred_region
      %73 = dma.done [#allocation7], 64
    $region37: #{tpu_custom_call.1} parent=1 // pred_fallthru
      _
    // Predicated region
    $region38: #{tpu_custom_call.1} parent=1 // pred_check
      _
    $region39: #{tpu_custom_call.1} parent=1 // pred_check_branch
      %75 = sbr.rel (0) target = $region41
    $region40: #{tpu_custom_call.1} parent=1 // pred_region
      %76 = dma.done [#allocation7], 192
    $region41: #{tpu_custom_call.1} parent=1 // pred_fallthru
      _
    // Predicated region
    $region42: #{tpu_custom_call.1} parent=1 // pred_check
      _
    $region43: #{tpu_custom_call.1} parent=1 // pred_check_branch
      %78 = sbr.rel (0) target = $region45
    $region44: #{tpu_custom_call.1} parent=1 // pred_region
      %79 = dma.done [#allocation10], 1024
    $region45: #{tpu_custom_call.1} parent=1 // pred_fallthru
      _
    %v81 = vld [vmem:[#allocation3] sm:$0xff]
    %v82 = vld [vmem:[#allocation3 + $0x8] sm:$0xff]
    %v83 = vld [vmem:[#allocation3 + $0x10] sm:$0xff]
    %v84 = vld [vmem:[#allocation3 + $0x18] sm:$0xff]
    %v85 = vld [vmem:[#allocation3 + $0x20] sm:$0xff]
    %v86 = vld [vmem:[#allocation3 + $0x28] sm:$0xff]
    %v87 = vld [vmem:[#allocation3 + $0x30] sm:$0xff]
    %v88 = vld [vmem:[#allocation3 + $0x38] sm:$0xff]
    %v89 = vld [vmem:[#allocation3 + $0x40] sm:$0xff]
    %v90 = vld [vmem:[#allocation3 + $0x48] sm:$0xff]
    %v91 = vld [vmem:[#allocation3 + $0x50] sm:$0xff]
    %v92 = vld [vmem:[#allocation3 + $0x58] sm:$0xff]
    %v93 = vld [vmem:[#allocation3 + $0x60] sm:$0xff]
    %v94 = vld [vmem:[#allocation3 + $0x68] sm:$0xff]
    %v95 = vld [vmem:[#allocation3 + $0x70] sm:$0xff]
    %v96 = vld [vmem:[#allocation3 + $0x78] sm:$0xff]
    %v97 = vld [vmem:[#allocation3 + $0x80] sm:$0xff]
    %v98 = vld [vmem:[#allocation3 + $0x88] sm:$0xff]
    %v99 = vld [vmem:[#allocation3 + $0x90] sm:$0xff]
    %v100 = vld [vmem:[#allocation3 + $0x98] sm:$0xff]
    %v101 = vld [vmem:[#allocation3 + $0xa0] sm:$0xff]
    %v102 = vld [vmem:[#allocation3 + $0xa8] sm:$0xff]
    %v103 = vld [vmem:[#allocation3 + $0xb0] sm:$0xff]
    %v104 = vld [vmem:[#allocation3 + $0xb8] sm:$0xff]
    %v105 = vpack.c.bf16 %v81, %v81
    %v106 = vpack.c.bf16 %v82, %v82
    %v107 = vpack.c.bf16 %v83, %v83
    %v108 = vpack.c.bf16 %v84, %v84
    %v109 = vpack.c.bf16 %v85, %v85
    %v110 = vpack.c.bf16 %v86, %v86
    %v111 = vpack.c.bf16 %v87, %v87
    %v112 = vpack.c.bf16 %v88, %v88
    %v113 = vpack.c.bf16 %v89, %v89
    %v114 = vpack.c.bf16 %v90, %v90
    %v115 = vpack.c.bf16 %v91, %v91
    %v116 = vpack.c.bf16 %v92, %v92
    %v117 = vpack.c.bf16 %v93, %v93
    %v118 = vpack.c.bf16 %v94, %v94
    %v119 = vpack.c.bf16 %v95, %v95
    %v120 = vpack.c.bf16 %v96, %v96
    %v121 = vpack.c.bf16 %v97, %v97
    %v122 = vpack.c.bf16 %v98, %v98
    %v123 = vpack.c.bf16 %v99, %v99
    %v124 = vpack.c.bf16 %v100, %v100
    %v125 = vpack.c.bf16 %v101, %v101
    %v126 = vpack.c.bf16 %v102, %v102
    %v127 = vpack.c.bf16 %v103, %v103
    %v128 = vpack.c.bf16 %v104, %v104
    %v129 = vld [vmem:[#allocation6] sm:$0xf]
    %v130 = vld [vmem:[%s2] sm:$0x1]
    %v132 = vlaneseq
    %v133 = vshrl.u32 %v132, 7
    %v134 = vsub.s32 0, %v133
    %v135 = vrot.slane %v130, %v134
    %v161 = vunpack.c.l.b16 %v105
    %v162 = vunpack.c.l.b16 %v106
    %v163 = vunpack.c.l.b16 %v107
    %v164 = vunpack.c.l.b16 %v108
    %v165 = vunpack.c.l.b16 %v109
    %v166 = vunpack.c.l.b16 %v110
    %v167 = vunpack.c.l.b16 %v111
    %v168 = vunpack.c.l.b16 %v112
    %v169 = vunpack.c.l.b16 %v113
    %v170 = vunpack.c.l.b16 %v114
    %v171 = vunpack.c.l.b16 %v115
    %v172 = vunpack.c.l.b16 %v116
    %v173 = vunpack.c.l.b16 %v117
    %v174 = vunpack.c.l.b16 %v118
    %v175 = vunpack.c.l.b16 %v119
    %v176 = vunpack.c.l.b16 %v120
    %v177 = vunpack.c.l.b16 %v121
    %v178 = vunpack.c.l.b16 %v122
    %v179 = vunpack.c.l.b16 %v123
    %v180 = vunpack.c.l.b16 %v124
    %v181 = vunpack.c.l.b16 %v125
    %v182 = vunpack.c.l.b16 %v126
    %v183 = vunpack.c.l.b16 %v127
    %v184 = vunpack.c.l.b16 %v128
    %v185 = vpack.c.b16 %v162, %v161
    %v186 = vpack.c.b16 %v164, %v163
    %v187 = vpack.c.b16 %v166, %v165
    %v188 = vpack.c.b16 %v168, %v167
    %v189 = vpack.c.b16 %v170, %v169
    %v190 = vpack.c.b16 %v172, %v171
    %v191 = vpack.c.b16 %v174, %v173
    %v192 = vpack.c.b16 %v176, %v175
    %v193 = vpack.c.b16 %v178, %v177
    %v194 = vpack.c.b16 %v180, %v179
    %v195 = vpack.c.b16 %v182, %v181
    %v196 = vpack.c.b16 %v184, %v183
    %vm197 = vcmask 64512
    %v199 = vsel %vm197, %v185, 0
    %v202 = vsel %vm197, %v186, 0
    %v205 = vsel %vm197, %v187, 0
    %v208 = vsel %vm197, %v188, 0
    %v211 = vsel %vm197, %v189, 0
    %v214 = vsel %vm197, %v190, 0
    %v217 = vsel %vm197, %v191, 0
    %v220 = vsel %vm197, %v192, 0
    %v223 = vsel %vm197, %v193, 0
    %v226 = vsel %vm197, %v194, 0
    %v229 = vsel %vm197, %v195, 0
    %v232 = vsel %vm197, %v196, 0
    %vm234 = vcmask 1043456
    %v236 = vsel %vm234, %v129, 0
    %238 = vmatprep.subr.bf16.mxu0 0
    %239 = vmatpush1.bf16.msra.mxu0 %v236
    %240 = vmatprep.subr.bf16.mxu0 0
    %241 = vmatpush1.bf16.msra.mxu0 0
    %242 = vmatprep.subr.bf16.mxu0 0
    %243 = vmatpush1.bf16.msra.mxu0 0
    %244 = vmatprep.subr.bf16.mxu0 0
    %245 = vmatpush1.bf16.msra.mxu0 0
    %246 = vmatprep.subr.bf16.mxu0 0
    %247 = vmatpush1.bf16.msra.mxu0 0
    %248 = vmatprep.subr.bf16.mxu0 0
    %249 = vmatpush1.bf16.msra.mxu0 0
    %250 = vmatprep.subr.bf16.mxu0 0
    %251 = vmatpush1.bf16.msra.mxu0 0
    %252 = vmatprep.subr.bf16.mxu0 0
    %253 = vmatpush1.bf16.msra.mxu0 0
    %254 = vmatprep.subr.bf16.mxu0 0
    %255 = vmatpush1.bf16.msra.mxu0 0
    %256 = vmatprep.subr.bf16.mxu0 0
    %257 = vmatpush1.bf16.msra.mxu0 0
    %258 = vmatprep.subr.bf16.mxu0 0
    %259 = vmatpush1.bf16.msra.mxu0 0
    %260 = vmatprep.subr.bf16.mxu0 0
    %261 = vmatpush1.bf16.msra.mxu0 0
    %262 = vmatprep.subr.bf16.mxu0 0
    %263 = vmatpush1.bf16.msra.mxu0 0
    %264 = vmatprep.subr.bf16.mxu0 0
    %265 = vmatpush1.bf16.msra.mxu0 0
    %266 = vmatprep.subr.bf16.mxu0 0
    %267 = vmatpush1.bf16.msra.mxu0 0
    %268 = vmatprep.subr.bf16.mxu0 0
    %269 = vmatpush1.bf16.msra.mxu0 0
    %270 = vmatprep.mubr.bf16.mxu0 0
    %271 = vmatmul.mubr.bf16.gmra.mrb[0].mxu0 %v199
    %v272 = vpop.f32.mrb[0].mxu0
    %v273 = vadd.f32 %v135, %v272
    %v274 = vpop.f32.mrb[0].mxu0
    %v275 = vpop.f32.mrb[0].mxu0
    %v276 = vadd.f32 %v135, %v275
    %v277 = vpop.f32.mrb[0].mxu0
    %278 = vmatprep.mubr.bf16.mxu0 0
    %279 = vmatmul.mubr.bf16.gmra.mrb[0].mxu0 %v202
    %v280 = vpop.f32.mrb[0].mxu0
    %v281 = vadd.f32 %v135, %v280
    %v282 = vpop.f32.mrb[0].mxu0
    %v283 = vpop.f32.mrb[0].mxu0
    %v284 = vadd.f32 %v135, %v283
    %v285 = vpop.f32.mrb[0].mxu0
    %286 = vmatprep.mubr.bf16.mxu0 0
    %287 = vmatmul.mubr.bf16.gmra.mrb[0].mxu0 %v205
    %v288 = vpop.f32.mrb[0].mxu0
    %v289 = vadd.f32 %v135, %v288
    %v290 = vpop.f32.mrb[0].mxu0
    %v291 = vpop.f32.mrb[0].mxu0
    %v292 = vadd.f32 %v135, %v291
    %v293 = vpop.f32.mrb[0].mxu0
    %294 = vmatprep.mubr.bf16.mxu0 0
    %295 = vmatmul.mubr.bf16.gmra.mrb[0].mxu0 %v208
    %v296 = vpop.f32.mrb[0].mxu0
    %v297 = vadd.f32 %v135, %v296
    %v298 = vpop.f32.mrb[0].mxu0
    %v299 = vpop.f32.mrb[0].mxu0
    %v300 = vadd.f32 %v135, %v299
    %v301 = vpop.f32.mrb[0].mxu0
    %302 = vmatprep.mubr.bf16.mxu0 0
    %303 = vmatmul.mubr.bf16.gmra.mrb[0].mxu0 %v211
    %v304 = vpop.f32.mrb[0].mxu0
    %v305 = vadd.f32 %v135, %v304
    %v306 = vpop.f32.mrb[0].mxu0
    %v307 = vpop.f32.mrb[0].mxu0
    %v308 = vadd.f32 %v135, %v307
    %v309 = vpop.f32.mrb[0].mxu0
    %310 = vmatprep.mubr.bf16.mxu0 0
    %311 = vmatmul.mubr.bf16.gmra.mrb[0].mxu0 %v214
    %v312 = vpop.f32.mrb[0].mxu0
    %v313 = vadd.f32 %v135, %v312
    %v314 = vpop.f32.mrb[0].mxu0
    %v315 = vpop.f32.mrb[0].mxu0
    %v316 = vadd.f32 %v135, %v315
    %v317 = vpop.f32.mrb[0].mxu0
    %318 = vmatprep.mubr.bf16.mxu0 0
    %319 = vmatmul.mubr.bf16.gmra.mrb[0].mxu0 %v217
    %v320 = vpop.f32.mrb[0].mxu0
    %v321 = vadd.f32 %v135, %v320
    %v322 = vpop.f32.mrb[0].mxu0
    %v323 = vpop.f32.mrb[0].mxu0
    %v324 = vadd.f32 %v135, %v323
    %v325 = vpop.f32.mrb[0].mxu0
    %326 = vmatprep.mubr.bf16.mxu0 0
    %327 = vmatmul.mubr.bf16.gmra.mrb[0].mxu0 %v220
    %v328 = vpop.f32.mrb[0].mxu0
    %v329 = vadd.f32 %v135, %v328
    %v330 = vpop.f32.mrb[0].mxu0
    %v331 = vpop.f32.mrb[0].mxu0
    %v332 = vadd.f32 %v135, %v331
    %v333 = vpop.f32.mrb[0].mxu0
    %334 = vmatprep.mubr.bf16.mxu0 0
    %335 = vmatmul.mubr.bf16.gmra.mrb[0].mxu0 %v223
    %v336 = vpop.f32.mrb[0].mxu0
    %v337 = vadd.f32 %v135, %v336
    %v338 = vpop.f32.mrb[0].mxu0
    %v339 = vpop.f32.mrb[0].mxu0
    %v340 = vadd.f32 %v135, %v339
    %v341 = vpop.f32.mrb[0].mxu0
    %342 = vmatprep.mubr.bf16.mxu0 0
    %343 = vmatmul.mubr.bf16.gmra.mrb[0].mxu0 %v226
    %v344 = vpop.f32.mrb[0].mxu0
    %v345 = vadd.f32 %v135, %v344
    %v346 = vpop.f32.mrb[0].mxu0
    %v347 = vpop.f32.mrb[0].mxu0
    %v348 = vadd.f32 %v135, %v347
    %v349 = vpop.f32.mrb[0].mxu0
    %350 = vmatprep.mubr.bf16.mxu0 0
    %351 = vmatmul.mubr.bf16.gmra.mrb[0].mxu0 %v229
    %v352 = vpop.f32.mrb[0].mxu0
    %v353 = vadd.f32 %v135, %v352
    %v354 = vpop.f32.mrb[0].mxu0
    %v355 = vpop.f32.mrb[0].mxu0
    %v356 = vadd.f32 %v135, %v355
    %v357 = vpop.f32.mrb[0].mxu0
    %358 = vmatprep.mubr.bf16.mxu0 0
    %359 = vmatmul.mubr.bf16.gmra.mrb[0].mxu0 %v232
    %v360 = vpop.f32.mrb[0].mxu0
    %v361 = vadd.f32 %v135, %v360
    %v362 = vpop.f32.mrb[0].mxu0
    %v363 = vpop.f32.mrb[0].mxu0
    %v364 = vadd.f32 %v135, %v363
    %v365 = vpop.f32.mrb[0].mxu0
    %366 = vdwg.mxu0
    %v367 = vmax.f32 %v273, 0.0
    %v368 = vmax.f32 %v276, 0.0
    %v369 = vmax.f32 %v281, 0.0
    %v370 = vmax.f32 %v284, 0.0
    %v371 = vmax.f32 %v289, 0.0
    %v372 = vmax.f32 %v292, 0.0
    %v373 = vmax.f32 %v297, 0.0
    %v374 = vmax.f32 %v300, 0.0
    %v375 = vmax.f32 %v305, 0.0
    %v376 = vmax.f32 %v308, 0.0
    %v377 = vmax.f32 %v313, 0.0
    %v378 = vmax.f32 %v316, 0.0
    %v379 = vmax.f32 %v321, 0.0
    %v380 = vmax.f32 %v324, 0.0
    %v381 = vmax.f32 %v329, 0.0
    %v382 = vmax.f32 %v332, 0.0
    %v383 = vmax.f32 %v337, 0.0
    %v384 = vmax.f32 %v340, 0.0
    %v385 = vmax.f32 %v345, 0.0
    %v386 = vmax.f32 %v348, 0.0
    %v387 = vmax.f32 %v353, 0.0
    %v388 = vmax.f32 %v356, 0.0
    %v389 = vmax.f32 %v361, 0.0
    %v390 = vmax.f32 %v364, 0.0
    %v391 = vmin.f32 %v367, 6.0
    %v392 = vmin.f32 %v368, 6.0
    %v393 = vmin.f32 %v369, 6.0
    %v394 = vmin.f32 %v370, 6.0
    %v395 = vmin.f32 %v371, 6.0
    %v396 = vmin.f32 %v372, 6.0
    %v397 = vmin.f32 %v373, 6.0
    %v398 = vmin.f32 %v374, 6.0
    %v399 = vmin.f32 %v375, 6.0
    %v400 = vmin.f32 %v376, 6.0
    %v401 = vmin.f32 %v377, 6.0
    %v402 = vmin.f32 %v378, 6.0
    %v403 = vmin.f32 %v379, 6.0
    %v404 = vmin.f32 %v380, 6.0
    %v405 = vmin.f32 %v381, 6.0
    %v406 = vmin.f32 %v382, 6.0
    %v407 = vmin.f32 %v383, 6.0
    %v408 = vmin.f32 %v384, 6.0
    %v409 = vmin.f32 %v385, 6.0
    %v410 = vmin.f32 %v386, 6.0
    %v411 = vmin.f32 %v387, 6.0
    %v412 = vmin.f32 %v388, 6.0
    %v413 = vmin.f32 %v389, 6.0
    %v414 = vmin.f32 %v390, 6.0
    %415 = vst [vmem:[#allocation2] sm:$0xff] 0
    %416 = vst [vmem:[#allocation2 + $0x50] sm:$0xff] 0
    %417 = vst [vmem:[#allocation2 + $0xa0] sm:$0xff] 0
    %s418 = scalar_lea.vmem [#allocation2], 72
    %419 = vst [vmem:[%s418] sm:$0xff] 0
    %420 = vst [vmem:[%s418 + $0x50] sm:$0xff] 0
    %421 = vst [vmem:[%s418 + $0xa0] sm:$0xff] 0
    %vm422 = vcmask 1040384
    %vm423 = vsmask.f32 256
    %vm424 = vmand %vm422, %vm423
    %v425 = vld [vmem:[#allocation2] sm:$0x1]
    %v426 = vsel %vm424, 0, %v425
    %427 = vst [vmem:[#allocation2] sm:$0x1] %v426
    %v428 = vld [vmem:[#allocation2 + $0x8] sm:$0x1]
    %v429 = vsel %vm424, 0, %v428
    %430 = vst [vmem:[#allocation2 + $0x8] sm:$0x1] %v429
    %v431 = vld [vmem:[#allocation2 + $0x10] sm:$0x1]
    %v432 = vsel %vm424, 0, %v431
    %433 = vst [vmem:[#allocation2 + $0x10] sm:$0x1] %v432
    %v434 = vld [vmem:[#allocation2 + $0x18] sm:$0x1]
    %v435 = vsel %vm424, 0, %v434
    %436 = vst [vmem:[#allocation2 + $0x18] sm:$0x1] %v435
    %v437 = vld [vmem:[#allocation2 + $0x20] sm:$0x1]
    %v438 = vsel %vm424, 0, %v437
    %439 = vst [vmem:[#allocation2 + $0x20] sm:$0x1] %v438
    %v440 = vld [vmem:[#allocation2 + $0x28] sm:$0x1]
    %v441 = vsel %vm424, 0, %v440
    %442 = vst [vmem:[#allocation2 + $0x28] sm:$0x1] %v441
    %v443 = vld [vmem:[#allocation2 + $0x30] sm:$0x1]
    %v444 = vsel %vm424, 0, %v443
    %445 = vst [vmem:[#allocation2 + $0x30] sm:$0x1] %v444
    %v446 = vld [vmem:[#allocation2 + $0x38] sm:$0x1]
    %v447 = vsel %vm424, 0, %v446
    %448 = vst [vmem:[#allocation2 + $0x38] sm:$0x1] %v447
    %v449 = vld [vmem:[#allocation2 + $0x40] sm:$0x1]
    %v450 = vsel %vm424, 0, %v449
    %451 = vst [vmem:[#allocation2 + $0x40] sm:$0x1] %v450
    %v452 = vld [vmem:[#allocation2 + $0x48] sm:$0x1]
    %v453 = vsel %vm424, 0, %v452
    %454 = vst [vmem:[#allocation2 + $0x48] sm:$0x1] %v453
    %v455 = vld [vmem:[#allocation2 + $0x50] sm:$0x1]
    %v456 = vsel %vm424, 0, %v455
    %457 = vst [vmem:[#allocation2 + $0x50] sm:$0x1] %v456
    %v458 = vld [vmem:[#allocation2 + $0x58] sm:$0x1]
    %v459 = vsel %vm424, 0, %v458
    %460 = vst [vmem:[#allocation2 + $0x58] sm:$0x1] %v459
    %v461 = vld [vmem:[#allocation2 + $0x60] sm:$0x1]
    %v462 = vsel %vm424, 0, %v461
    %463 = vst [vmem:[#allocation2 + $0x60] sm:$0x1] %v462
    %v464 = vld [vmem:[#allocation2 + $0x68] sm:$0x1]
    %v465 = vsel %vm424, 0, %v464
    %466 = vst [vmem:[#allocation2 + $0x68] sm:$0x1] %v465
    %v467 = vld [vmem:[#allocation2 + $0x70] sm:$0x1]
    %v468 = vsel %vm424, 0, %v467
    %469 = vst [vmem:[#allocation2 + $0x70] sm:$0x1] %v468
    %v470 = vld [vmem:[#allocation2 + $0x78] sm:$0x1]
    %v471 = vsel %vm424, 0, %v470
    %472 = vst [vmem:[#allocation2 + $0x78] sm:$0x1] %v471
    %v473 = vld [vmem:[#allocation2 + $0x80] sm:$0x1]
    %v474 = vsel %vm424, 0, %v473
    %475 = vst [vmem:[#allocation2 + $0x80] sm:$0x1] %v474
    %v476 = vld [vmem:[#allocation2 + $0x88] sm:$0x1]
    %v477 = vsel %vm424, 0, %v476
    %478 = vst [vmem:[#allocation2 + $0x88] sm:$0x1] %v477
    %v479 = vld [vmem:[#allocation2 + $0x90] sm:$0x1]
    %v480 = vsel %vm424, 0, %v479
    %481 = vst [vmem:[#allocation2 + $0x90] sm:$0x1] %v480
    %v482 = vld [vmem:[#allocation2 + $0x98] sm:$0x1]
    %v483 = vsel %vm424, 0, %v482
    %484 = vst [vmem:[#allocation2 + $0x98] sm:$0x1] %v483
    %v485 = vld [vmem:[#allocation2 + $0xa0] sm:$0x1]
    %v486 = vsel %vm424, 0, %v485
    %487 = vst [vmem:[#allocation2 + $0xa0] sm:$0x1] %v486
    %v488 = vld [vmem:[#allocation2 + $0xa8] sm:$0x1]
    %v489 = vsel %vm424, 0, %v488
    %490 = vst [vmem:[#allocation2 + $0xa8] sm:$0x1] %v489
    %v491 = vld [vmem:[#allocation2 + $0xb0] sm:$0x1]
    %v492 = vsel %vm424, 0, %v491
    %493 = vst [vmem:[#allocation2 + $0xb0] sm:$0x1] %v492
    %v494 = vld [vmem:[#allocation2 + $0xb8] sm:$0x1]
    %v495 = vsel %vm424, 0, %v494
    %496 = vst [vmem:[#allocation2 + $0xb8] sm:$0x1] %v495
    %v497 = vld [vmem:[#allocation2 + $0xc0] sm:$0x1]
    %v498 = vsel %vm424, 0, %v497
    %499 = vst [vmem:[#allocation2 + $0xc0] sm:$0x1] %v498
    %v500 = vld [vmem:[#allocation2 + $0xc8] sm:$0x1]
    %v501 = vsel %vm424, 0, %v500
    %502 = vst [vmem:[#allocation2 + $0xc8] sm:$0x1] %v501
    %v503 = vld [vmem:[#allocation2 + $0xd0] sm:$0x1]
    %v504 = vsel %vm424, 0, %v503
    %505 = vst [vmem:[#allocation2 + $0xd0] sm:$0x1] %v504
    %v506 = vld [vmem:[#allocation2 + $0xd8] sm:$0x1]
    %v507 = vsel %vm424, 0, %v506
    %508 = vst [vmem:[#allocation2 + $0xd8] sm:$0x1] %v507
    %v509 = vld [vmem:[#allocation2 + $0xe0] sm:$0x1]
    %v510 = vsel %vm424, 0, %v509
    %511 = vst [vmem:[#allocation2 + $0xe0] sm:$0x1] %v510
    %v512 = vld [vmem:[#allocation2 + $0xe8] sm:$0x1]
    %v513 = vsel %vm424, 0, %v512
    %514 = vst [vmem:[#allocation2 + $0xe8] sm:$0x1] %v513
    %vm515 = vcmask 1047556
    %vm516 = vsmask.f32 7954
    %vm517 = vmand %vm515, %vm516
    %v518 = vld [vmem:[#allocation2] sm:$0xf0]
    %v519 = vsel %vm517, 0, %v518
    %520 = vst [vmem:[#allocation2] sm:$0xf0] %v519
    %v521 = vld [vmem:[#allocation2 + $0x8] sm:$0xf0]
    %v522 = vsel %vm517, 0, %v521
    %523 = vst [vmem:[#allocation2 + $0x8] sm:$0xf0] %v522
    %v524 = vld [vmem:[#allocation2 + $0x10] sm:$0xf0]
    %v525 = vsel %vm517, 0, %v524
    %526 = vst [vmem:[#allocation2 + $0x10] sm:$0xf0] %v525
    %v527 = vld [vmem:[#allocation2 + $0x18] sm:$0xf0]
    %v528 = vsel %vm517, 0, %v527
    %529 = vst [vmem:[#allocation2 + $0x18] sm:$0xf0] %v528
    %v530 = vld [vmem:[#allocation2 + $0x20] sm:$0xf0]
    %v531 = vsel %vm517, 0, %v530
    %532 = vst [vmem:[#allocation2 + $0x20] sm:$0xf0] %v531
    %v533 = vld [vmem:[#allocation2 + $0x28] sm:$0xf0]
    %v534 = vsel %vm517, 0, %v533
    %535 = vst [vmem:[#allocation2 + $0x28] sm:$0xf0] %v534
    %v536 = vld [vmem:[#allocation2 + $0x30] sm:$0xf0]
    %v537 = vsel %vm517, 0, %v536
    %538 = vst [vmem:[#allocation2 + $0x30] sm:$0xf0] %v537
    %v539 = vld [vmem:[#allocation2 + $0x38] sm:$0xf0]
    %v540 = vsel %vm517, 0, %v539
    %541 = vst [vmem:[#allocation2 + $0x38] sm:$0xf0] %v540
    %v542 = vld [vmem:[#allocation2 + $0x40] sm:$0xf0]
    %v543 = vsel %vm517, 0, %v542
    %544 = vst [vmem:[#allocation2 + $0x40] sm:$0xf0] %v543
    %v545 = vld [vmem:[#allocation2 + $0x48] sm:$0xf0]
    %v546 = vsel %vm517, 0, %v545
    %547 = vst [vmem:[#allocation2 + $0x48] sm:$0xf0] %v546
    %v548 = vld [vmem:[#allocation2 + $0x50] sm:$0xf0]
    %v549 = vsel %vm517, 0, %v548
    %550 = vst [vmem:[#allocation2 + $0x50] sm:$0xf0] %v549
    %v551 = vld [vmem:[#allocation2 + $0x58] sm:$0xf0]
    %v552 = vsel %vm517, 0, %v551
    %553 = vst [vmem:[#allocation2 + $0x58] sm:$0xf0] %v552
    %v554 = vld [vmem:[#allocation2 + $0x60] sm:$0xf0]
    %v555 = vsel %vm517, 0, %v554
    %556 = vst [vmem:[#allocation2 + $0x60] sm:$0xf0] %v555
    %v557 = vld [vmem:[#allocation2 + $0x68] sm:$0xf0]
    %v558 = vsel %vm517, 0, %v557
    %559 = vst [vmem:[#allocation2 + $0x68] sm:$0xf0] %v558
    %v560 = vld [vmem:[#allocation2 + $0x70] sm:$0xf0]
    %v561 = vsel %vm517, 0, %v560
    %562 = vst [vmem:[#allocation2 + $0x70] sm:$0xf0] %v561
    %v563 = vld [vmem:[#allocation2 + $0x78] sm:$0xf0]
    %v564 = vsel %vm517, 0, %v563
    %565 = vst [vmem:[#allocation2 + $0x78] sm:$0xf0] %v564
    %v566 = vld [vmem:[#allocation2 + $0x80] sm:$0xf0]
    %v567 = vsel %vm517, 0, %v566
    %568 = vst [vmem:[#allocation2 + $0x80] sm:$0xf0] %v567
    %v569 = vld [vmem:[#allocation2 + $0x88] sm:$0xf0]
    %v570 = vsel %vm517, 0, %v569
    %571 = vst [vmem:[#allocation2 + $0x88] sm:$0xf0] %v570
    %v572 = vld [vmem:[#allocation2 + $0x90] sm:$0xf0]
    %v573 = vsel %vm517, 0, %v572
    %574 = vst [vmem:[#allocation2 + $0x90] sm:$0xf0] %v573
    %v575 = vld [vmem:[#allocation2 + $0x98] sm:$0xf0]
    %v576 = vsel %vm517, 0, %v575
    %577 = vst [vmem:[#allocation2 + $0x98] sm:$0xf0] %v576
    %v578 = vld [vmem:[#allocation2 + $0xa0] sm:$0xf0]
    %v579 = vsel %vm517, 0, %v578
    %580 = vst [vmem:[#allocation2 + $0xa0] sm:$0xf0] %v579
    %v581 = vld [vmem:[#allocation2 + $0xa8] sm:$0xf0]
    %v582 = vsel %vm517, 0, %v581
    %583 = vst [vmem:[#allocation2 + $0xa8] sm:$0xf0] %v582
    %v584 = vld [vmem:[#allocation2 + $0xb0] sm:$0xf0]
    %v585 = vsel %vm517, 0, %v584
    %586 = vst [vmem:[#allocation2 + $0xb0] sm:$0xf0] %v585
    %v587 = vld [vmem:[#allocation2 + $0xb8] sm:$0xf0]
    %v588 = vsel %vm517, 0, %v587
    %589 = vst [vmem:[#allocation2 + $0xb8] sm:$0xf0] %v588
    %v590 = vld [vmem:[#allocation2 + $0xc0] sm:$0xf0]
    %v591 = vsel %vm517, 0, %v590
    %592 = vst [vmem:[#allocation2 + $0xc0] sm:$0xf0] %v591
    %v593 = vld [vmem:[#allocation2 + $0xc8] sm:$0xf0]
    %v594 = vsel %vm517, 0, %v593
    %595 = vst [vmem:[#allocation2 + $0xc8] sm:$0xf0] %v594
    %v596 = vld [vmem:[#allocation2 + $0xd0] sm:$0xf0]
    %v597 = vsel %vm517, 0, %v596
    %598 = vst [vmem:[#allocation2 + $0xd0] sm:$0xf0] %v597
    %v599 = vld [vmem:[#allocation2 + $0xd8] sm:$0xf0]
    %v600 = vsel %vm517, 0, %v599
    %601 = vst [vmem:[#allocation2 + $0xd8] sm:$0xf0] %v600
    %v602 = vld [vmem:[#allocation2 + $0xe0] sm:$0xf0]
    %v603 = vsel %vm517, 0, %v602
    %604 = vst [vmem:[#allocation2 + $0xe0] sm:$0xf0] %v603
    %v605 = vld [vmem:[#allocation2 + $0xe8] sm:$0xf0]
    %v606 = vsel %vm517, 0, %v605
    %607 = vst [vmem:[#allocation2 + $0xe8] sm:$0xf0] %v606
    %v608 = vpack.c.bf16 %v391, %v391
    %v609 = vpack.c.bf16 %v392, %v392
    %v610 = vpack.c.bf16 %v393, %v393
    %v611 = vpack.c.bf16 %v394, %v394
    %v612 = vpack.c.bf16 %v395, %v395
    %v613 = vpack.c.bf16 %v396, %v396
    %v614 = vpack.c.bf16 %v397, %v397
    %v615 = vpack.c.bf16 %v398, %v398
    %v616 = vpack.c.bf16 %v399, %v399
    %v617 = vpack.c.bf16 %v400, %v400
    %v618 = vpack.c.bf16 %v401, %v401
    %v619 = vpack.c.bf16 %v402, %v402
    %v620 = vpack.c.bf16 %v403, %v403
    %v621 = vpack.c.bf16 %v404, %v404
    %v622 = vpack.c.bf16 %v405, %v405
    %v623 = vpack.c.bf16 %v406, %v406
    %v624 = vpack.c.bf16 %v407, %v407
    %v625 = vpack.c.bf16 %v408, %v408
    %v626 = vpack.c.bf16 %v409, %v409
    %v627 = vpack.c.bf16 %v410, %v410
    %v628 = vpack.c.bf16 %v411, %v411
    %v629 = vpack.c.bf16 %v412, %v412
    %v630 = vpack.c.bf16 %v413, %v413
    %v631 = vpack.c.bf16 %v414, %v414
    %v633 = vshrl.u32 %v608, 16
    %v635 = vrot.slane %v633, 7
    %v636 = vshll.u32 %v608, 16
    %v638 = vor.u32 %v635, %v636
    %v640 = vshrl.u32 %v609, 16
    %v642 = vrot.slane %v640, 7
    %v643 = vshll.u32 %v609, 16
    %v645 = vor.u32 %v642, %v643
    %v647 = vshrl.u32 %v610, 16
    %v649 = vrot.slane %v647, 7
    %v650 = vshll.u32 %v610, 16
    %v652 = vor.u32 %v649, %v650
    %v654 = vshrl.u32 %v611, 16
    %v656 = vrot.slane %v654, 7
    %v657 = vshll.u32 %v611, 16
    %v659 = vor.u32 %v656, %v657
    %v661 = vshrl.u32 %v612, 16
    %v663 = vrot.slane %v661, 7
    %v664 = vshll.u32 %v612, 16
    %v666 = vor.u32 %v663, %v664
    %v668 = vshrl.u32 %v613, 16
    %v670 = vrot.slane %v668, 7
    %v671 = vshll.u32 %v613, 16
    %v673 = vor.u32 %v670, %v671
    %v675 = vshrl.u32 %v614, 16
    %v677 = vrot.slane %v675, 7
    %v678 = vshll.u32 %v614, 16
    %v680 = vor.u32 %v677, %v678
    %v682 = vshrl.u32 %v615, 16
    %v684 = vrot.slane %v682, 7
    %v685 = vshll.u32 %v615, 16
    %v687 = vor.u32 %v684, %v685
    %v689 = vshrl.u32 %v616, 16
    %v691 = vrot.slane %v689, 7
    %v692 = vshll.u32 %v616, 16
    %v694 = vor.u32 %v691, %v692
    %v696 = vshrl.u32 %v617, 16
    %v698 = vrot.slane %v696, 7
    %v699 = vshll.u32 %v617, 16
    %v701 = vor.u32 %v698, %v699
    %v703 = vshrl.u32 %v618, 16
    %v705 = vrot.slane %v703, 7
    %v706 = vshll.u32 %v618, 16
    %v708 = vor.u32 %v705, %v706
    %v710 = vshrl.u32 %v619, 16
    %v712 = vrot.slane %v710, 7
    %v713 = vshll.u32 %v619, 16
    %v715 = vor.u32 %v712, %v713
    %v717 = vshrl.u32 %v620, 16
    %v719 = vrot.slane %v717, 7
    %v720 = vshll.u32 %v620, 16
    %v722 = vor.u32 %v719, %v720
    %v724 = vshrl.u32 %v621, 16
    %v726 = vrot.slane %v724, 7
    %v727 = vshll.u32 %v621, 16
    %v729 = vor.u32 %v726, %v727
    %v731 = vshrl.u32 %v622, 16
    %v733 = vrot.slane %v731, 7
    %v734 = vshll.u32 %v622, 16
    %v736 = vor.u32 %v733, %v734
    %v738 = vshrl.u32 %v623, 16
    %v740 = vrot.slane %v738, 7
    %v741 = vshll.u32 %v623, 16
    %v743 = vor.u32 %v740, %v741
    %v745 = vshrl.u32 %v624, 16
    %v747 = vrot.slane %v745, 7
    %v748 = vshll.u32 %v624, 16
    %v750 = vor.u32 %v747, %v748
    %v752 = vshrl.u32 %v625, 16
    %v754 = vrot.slane %v752, 7
    %v755 = vshll.u32 %v625, 16
    %v757 = vor.u32 %v754, %v755
    %v759 = vshrl.u32 %v626, 16
    %v761 = vrot.slane %v759, 7
    %v762 = vshll.u32 %v626, 16
    %v764 = vor.u32 %v761, %v762
    %v766 = vshrl.u32 %v627, 16
    %v768 = vrot.slane %v766, 7
    %v769 = vshll.u32 %v627, 16
    %v771 = vor.u32 %v768, %v769
    %v773 = vshrl.u32 %v628, 16
    %v775 = vrot.slane %v773, 7
    %v776 = vshll.u32 %v628, 16
    %v778 = vor.u32 %v775, %v776
    %v780 = vshrl.u32 %v629, 16
    %v782 = vrot.slane %v780, 7
    %v783 = vshll.u32 %v629, 16
    %v785 = vor.u32 %v782, %v783
    %v787 = vshrl.u32 %v630, 16
    %v789 = vrot.slane %v787, 7
    %v790 = vshll.u32 %v630, 16
    %v792 = vor.u32 %v789, %v790
    %v794 = vshrl.u32 %v631, 16
    %v796 = vrot.slane %v794, 7
    %v797 = vshll.u32 %v631, 16
    %v799 = vor.u32 %v796, %v797
    %s824 = scalar_lea.vmem [#allocation2], 8
    %vm825 = vcmask 1044480
    %vm826 = vsmask.f32 4354
    %vm827 = vmand %vm825, %vm826
    %v828 = vld [vmem:[%s824] sm:$0x1f]
    %v829 = vsel %vm827, %v638, %v828
    %830 = vst [vmem:[%s824] sm:$0x1f] %v829
    %v831 = vld [vmem:[%s824 + $0x8] sm:$0x1f]
    %v832 = vsel %vm827, %v645, %v831
    %833 = vst [vmem:[%s824 + $0x8] sm:$0x1f] %v832
    %v834 = vld [vmem:[%s824 + $0x10] sm:$0x1f]
    %v835 = vsel %vm827, %v652, %v834
    %836 = vst [vmem:[%s824 + $0x10] sm:$0x1f] %v835
    %v837 = vld [vmem:[%s824 + $0x18] sm:$0x1f]
    %v838 = vsel %vm827, %v659, %v837
    %839 = vst [vmem:[%s824 + $0x18] sm:$0x1f] %v838
    %v840 = vld [vmem:[%s824 + $0x20] sm:$0x1f]
    %v841 = vsel %vm827, %v666, %v840
    %842 = vst [vmem:[%s824 + $0x20] sm:$0x1f] %v841
    %v843 = vld [vmem:[%s824 + $0x28] sm:$0x1f]
    %v844 = vsel %vm827, %v673, %v843
    %845 = vst [vmem:[%s824 + $0x28] sm:$0x1f] %v844
    %v846 = vld [vmem:[%s824 + $0x30] sm:$0x1f]
    %v847 = vsel %vm827, %v680, %v846
    %848 = vst [vmem:[%s824 + $0x30] sm:$0x1f] %v847
    %v849 = vld [vmem:[%s824 + $0x38] sm:$0x1f]
    %v850 = vsel %vm827, %v687, %v849
    %851 = vst [vmem:[%s824 + $0x38] sm:$0x1f] %v850
    %v852 = vld [vmem:[%s824 + $0x50] sm:$0x1f]
    %v853 = vsel %vm827, %v694, %v852
    %854 = vst [vmem:[%s824 + $0x50] sm:$0x1f] %v853
    %v855 = vld [vmem:[%s824 + $0x58] sm:$0x1f]
    %v856 = vsel %vm827, %v701, %v855
    %857 = vst [vmem:[%s824 + $0x58] sm:$0x1f] %v856
    %v858 = vld [vmem:[%s824 + $0x60] sm:$0x1f]
    %v859 = vsel %vm827, %v708, %v858
    %860 = vst [vmem:[%s824 + $0x60] sm:$0x1f] %v859
    %v861 = vld [vmem:[%s824 + $0x68] sm:$0x1f]
    %v862 = vsel %vm827, %v715, %v861
    %863 = vst [vmem:[%s824 + $0x68] sm:$0x1f] %v862
    %v864 = vld [vmem:[%s824 + $0x70] sm:$0x1f]
    %v865 = vsel %vm827, %v722, %v864
    %866 = vst [vmem:[%s824 + $0x70] sm:$0x1f] %v865
    %v867 = vld [vmem:[%s824 + $0x78] sm:$0x1f]
    %v868 = vsel %vm827, %v729, %v867
    %869 = vst [vmem:[%s824 + $0x78] sm:$0x1f] %v868
    %v870 = vld [vmem:[%s824 + $0x80] sm:$0x1f]
    %v871 = vsel %vm827, %v736, %v870
    %872 = vst [vmem:[%s824 + $0x80] sm:$0x1f] %v871
    %v873 = vld [vmem:[%s824 + $0x88] sm:$0x1f]
    %v874 = vsel %vm827, %v743, %v873
    %875 = vst [vmem:[%s824 + $0x88] sm:$0x1f] %v874
    %v876 = vld [vmem:[%s824 + $0xa0] sm:$0x1f]
    %v877 = vsel %vm827, %v750, %v876
    %878 = vst [vmem:[%s824 + $0xa0] sm:$0x1f] %v877
    %v879 = vld [vmem:[%s824 + $0xa8] sm:$0x1f]
    %v880 = vsel %vm827, %v757, %v879
    %881 = vst [vmem:[%s824 + $0xa8] sm:$0x1f] %v880
    %v882 = vld [vmem:[%s824 + $0xb0] sm:$0x1f]
    %v883 = vsel %vm827, %v764, %v882
    %884 = vst [vmem:[%s824 + $0xb0] sm:$0x1f] %v883
    %v885 = vld [vmem:[%s824 + $0xb8] sm:$0x1f]
    %v886 = vsel %vm827, %v771, %v885
    %887 = vst [vmem:[%s824 + $0xb8] sm:$0x1f] %v886
    %v888 = vld [vmem:[%s824 + $0xc0] sm:$0x1f]
    %v889 = vsel %vm827, %v778, %v888
    %890 = vst [vmem:[%s824 + $0xc0] sm:$0x1f] %v889
    %v891 = vld [vmem:[%s824 + $0xc8] sm:$0x1f]
    %v892 = vsel %vm827, %v785, %v891
    %893 = vst [vmem:[%s824 + $0xc8] sm:$0x1f] %v892
    %v894 = vld [vmem:[%s824 + $0xd0] sm:$0x1f]
    %v895 = vsel %vm827, %v792, %v894
    %896 = vst [vmem:[%s824 + $0xd0] sm:$0x1f] %v895
    %v897 = vld [vmem:[%s824 + $0xd8] sm:$0x1f]
    %v898 = vsel %vm827, %v799, %v897
    %899 = vst [vmem:[%s824 + $0xd8] sm:$0x1f] %v898
    %v900 = vld [vmem:[#allocation8] sm:$0x7]
    %v901 = vld [vmem:[#allocation8 + $0x4] sm:$0x7]
    %v902 = vld [vmem:[#allocation8 + $0x8] sm:$0x7]
    %v903 = vld [vmem:[#allocation2] sm:$0xf]
    %v904 = vld [vmem:[#allocation2 + $0x8] sm:$0xf]
    %v905 = vld [vmem:[#allocation2 + $0x10] sm:$0xf]
    %v906 = vld [vmem:[#allocation2 + $0x18] sm:$0xf]
    %v907 = vld [vmem:[#allocation2 + $0x20] sm:$0xf]
    %v908 = vld [vmem:[#allocation2 + $0x28] sm:$0xf]
    %v909 = vld [vmem:[#allocation2 + $0x30] sm:$0xf]
    %v910 = vld [vmem:[#allocation2 + $0x38] sm:$0xf]
    %v911 = vld [vmem:[#allocation2 + $0x40] sm:$0xf]
    %v912 = vld [vmem:[#allocation2 + $0x48] sm:$0xf]
    %v913 = vld [vmem:[#allocation2 + $0x50] sm:$0xf]
    %v914 = vld [vmem:[#allocation2 + $0x58] sm:$0xf]
    %v915 = vld [vmem:[#allocation2 + $0x60] sm:$0xf]
    %v916 = vld [vmem:[#allocation2 + $0x68] sm:$0xf]
    %v917 = vld [vmem:[#allocation2 + $0x70] sm:$0xf]
    %v918 = vld [vmem:[#allocation2 + $0x78] sm:$0xf]
    %v919 = vld [vmem:[#allocation2 + $0x80] sm:$0xf]
    %v920 = vld [vmem:[#allocation2 + $0x88] sm:$0xf]
    %v921 = vld [vmem:[#allocation2 + $0x90] sm:$0xf]
    %v922 = vld [vmem:[#allocation2 + $0x98] sm:$0xf]
    %v923 = vld [vmem:[#allocation2 + $0xa0] sm:$0xf]
    %v924 = vld [vmem:[#allocation2 + $0xa8] sm:$0xf]
    %v925 = vld [vmem:[#allocation2 + $0xb0] sm:$0xf]
    %v926 = vld [vmem:[#allocation2 + $0xb8] sm:$0xf]
    %v927 = vld [vmem:[#allocation2 + $0xc0] sm:$0xf]
    %v928 = vld [vmem:[#allocation2 + $0xc8] sm:$0xf]
    %v929 = vld [vmem:[#allocation2 + $0xd0] sm:$0xf]
    %v930 = vld [vmem:[#allocation2 + $0xd8] sm:$0xf]
    %v931 = vld [vmem:[#allocation2 + $0xe0] sm:$0xf]
    %v932 = vld [vmem:[#allocation2 + $0xe8] sm:$0xf]
    %v933 = vunpack.c.l.bf16 %v903
    %v934 = vunpack.c.l.bf16 %v904
    %v935 = vunpack.c.l.bf16 %v905
    %v936 = vunpack.c.l.bf16 %v906
    %v937 = vunpack.c.l.bf16 %v907
    %v938 = vunpack.c.l.bf16 %v908
    %v939 = vunpack.c.l.bf16 %v909
    %v940 = vunpack.c.l.bf16 %v910
    %v941 = vunpack.c.l.bf16 %v911
    %v942 = vunpack.c.l.bf16 %v912
    %v943 = vunpack.c.l.bf16 %v913
    %v944 = vunpack.c.l.bf16 %v914
    %v945 = vunpack.c.l.bf16 %v915
    %v946 = vunpack.c.l.bf16 %v916
    %v947 = vunpack.c.l.bf16 %v917
    %v948 = vunpack.c.l.bf16 %v918
    %v949 = vunpack.c.l.bf16 %v919
    %v950 = vunpack.c.l.bf16 %v920
    %v951 = vunpack.c.l.bf16 %v921
    %v952 = vunpack.c.l.bf16 %v922
    %v953 = vunpack.c.l.bf16 %v923
    %v954 = vunpack.c.l.bf16 %v924
    %v955 = vunpack.c.l.bf16 %v925
    %v956 = vunpack.c.l.bf16 %v926
    %v957 = vunpack.c.l.bf16 %v927
    %v958 = vunpack.c.l.bf16 %v928
    %v959 = vunpack.c.l.bf16 %v929
    %v960 = vunpack.c.l.bf16 %v930
    %v961 = vunpack.c.l.bf16 %v931
    %v962 = vunpack.c.l.bf16 %v932
    %v963 = vlaneseq
    %v964 = vshrl.u32 %v963, 7
    %v965 = vsub.s32 0, %v964
    %v966 = vrot.slane %v900, %v965
    %v967 = vmul.f32 %v933, %v966
    %v968 = vmul.f32 %v934, %v966
    %v969 = vmul.f32 %v935, %v966
    %v970 = vmul.f32 %v936, %v966
    %v971 = vmul.f32 %v937, %v966
    %v972 = vmul.f32 %v938, %v966
    %v973 = vmul.f32 %v939, %v966
    %v974 = vmul.f32 %v940, %v966
    %v975 = vmul.f32 %v943, %v966
    %v976 = vmul.f32 %v944, %v966
    %v977 = vmul.f32 %v945, %v966
    %v978 = vmul.f32 %v946, %v966
    %v979 = vmul.f32 %v947, %v966
    %v980 = vmul.f32 %v948, %v966
    %v981 = vmul.f32 %v949, %v966
    %v982 = vmul.f32 %v950, %v966
    %v983 = vmul.f32 %v953, %v966
    %v984 = vmul.f32 %v954, %v966
    %v985 = vmul.f32 %v955, %v966
    %v986 = vmul.f32 %v956, %v966
    %v987 = vmul.f32 %v957, %v966
    %v988 = vmul.f32 %v958, %v966
    %v989 = vmul.f32 %v959, %v966
    %v990 = vmul.f32 %v960, %v966
    %v991 = vlaneseq
    %v992 = vshrl.u32 %v991, 7
    %v993 = vsub.s32 0, %v992
    %v994 = vrot.slane %v901, %v993
    %v995 = vmul.f32 %v934, %v994
    %v996 = vmul.f32 %v935, %v994
    %v997 = vmul.f32 %v936, %v994
    %v998 = vmul.f32 %v937, %v994
    %v999 = vmul.f32 %v938, %v994
    %v1000 = vmul.f32 %v939, %v994
    %v1001 = vmul.f32 %v940, %v994
    %v1002 = vmul.f32 %v941, %v994
    %v1003 = vmul.f32 %v944, %v994
    %v1004 = vmul.f32 %v945, %v994
    %v1005 = vmul.f32 %v946, %v994
    %v1006 = vmul.f32 %v947, %v994
    %v1007 = vmul.f32 %v948, %v994
    %v1008 = vmul.f32 %v949, %v994
    %v1009 = vmul.f32 %v950, %v994
    %v1010 = vmul.f32 %v951, %v994
    %v1011 = vmul.f32 %v954, %v994
    %v1012 = vmul.f32 %v955, %v994
    %v1013 = vmul.f32 %v956, %v994
    %v1014 = vmul.f32 %v957, %v994
    %v1015 = vmul.f32 %v958, %v994
    %v1016 = vmul.f32 %v959, %v994
    %v1017 = vmul.f32 %v960, %v994
    %v1018 = vmul.f32 %v961, %v994
    %v1019 = vadd.f32 %v967, %v995
    %v1020 = vadd.f32 %v968, %v996
    %v1021 = vadd.f32 %v969, %v997
    %v1022 = vadd.f32 %v970, %v998
    %v1023 = vadd.f32 %v971, %v999
    %v1024 = vadd.f32 %v972, %v1000
    %v1025 = vadd.f32 %v973, %v1001
    %v1026 = vadd.f32 %v974, %v1002
    %v1027 = vadd.f32 %v975, %v1003
    %v1028 = vadd.f32 %v976, %v1004
    %v1029 = vadd.f32 %v977, %v1005
    %v1030 = vadd.f32 %v978, %v1006
    %v1031 = vadd.f32 %v979, %v1007
    %v1032 = vadd.f32 %v980, %v1008
    %v1033 = vadd.f32 %v981, %v1009
    %v1034 = vadd.f32 %v982, %v1010
    %v1035 = vadd.f32 %v983, %v1011
    %v1036 = vadd.f32 %v984, %v1012
    %v1037 = vadd.f32 %v985, %v1013
    %v1038 = vadd.f32 %v986, %v1014
    %v1039 = vadd.f32 %v987, %v1015
    %v1040 = vadd.f32 %v988, %v1016
    %v1041 = vadd.f32 %v989, %v1017
    %v1042 = vadd.f32 %v990, %v1018
    %v1043 = vlaneseq
    %v1044 = vshrl.u32 %v1043, 7
    %v1045 = vsub.s32 0, %v1044
    %v1046 = vrot.slane %v902, %v1045
    %v1047 = vmul.f32 %v935, %v1046
    %v1048 = vmul.f32 %v936, %v1046
    %v1049 = vmul.f32 %v937, %v1046
    %v1050 = vmul.f32 %v938, %v1046
    %v1051 = vmul.f32 %v939, %v1046
    %v1052 = vmul.f32 %v940, %v1046
    %v1053 = vmul.f32 %v941, %v1046
    %v1054 = vmul.f32 %v942, %v1046
    %v1055 = vmul.f32 %v945, %v1046
    %v1056 = vmul.f32 %v946, %v1046
    %v1057 = vmul.f32 %v947, %v1046
    %v1058 = vmul.f32 %v948, %v1046
    %v1059 = vmul.f32 %v949, %v1046
    %v1060 = vmul.f32 %v950, %v1046
    %v1061 = vmul.f32 %v951, %v1046
    %v1062 = vmul.f32 %v952, %v1046
    %v1063 = vmul.f32 %v955, %v1046
    %v1064 = vmul.f32 %v956, %v1046
    %v1065 = vmul.f32 %v957, %v1046
    %v1066 = vmul.f32 %v958, %v1046
    %v1067 = vmul.f32 %v959, %v1046
    %v1068 = vmul.f32 %v960, %v1046
    %v1069 = vmul.f32 %v961, %v1046
    %v1070 = vmul.f32 %v962, %v1046
    %v1071 = vadd.f32 %v1019, %v1047
    %v1072 = vadd.f32 %v1020, %v1048
    %v1073 = vadd.f32 %v1021, %v1049
    %v1074 = vadd.f32 %v1022, %v1050
    %v1075 = vadd.f32 %v1023, %v1051
    %v1076 = vadd.f32 %v1024, %v1052
    %v1077 = vadd.f32 %v1025, %v1053
    %v1078 = vadd.f32 %v1026, %v1054
    %v1079 = vadd.f32 %v1027, %v1055
    %v1080 = vadd.f32 %v1028, %v1056
    %v1081 = vadd.f32 %v1029, %v1057
    %v1082 = vadd.f32 %v1030, %v1058
    %v1083 = vadd.f32 %v1031, %v1059
    %v1084 = vadd.f32 %v1032, %v1060
    %v1085 = vadd.f32 %v1033, %v1061
    %v1086 = vadd.f32 %v1034, %v1062
    %v1087 = vadd.f32 %v1035, %v1063
    %v1088 = vadd.f32 %v1036, %v1064
    %v1089 = vadd.f32 %v1037, %v1065
    %v1090 = vadd.f32 %v1038, %v1066
    %v1091 = vadd.f32 %v1039, %v1067
    %v1092 = vadd.f32 %v1040, %v1068
    %v1093 = vadd.f32 %v1041, %v1069
    %v1094 = vadd.f32 %v1042, %v1070
    %v1095 = vld [vmem:[#allocation2] sm:$0x1f]
    %v1096 = vld [vmem:[#allocation2 + $0x8] sm:$0x1f]
    %v1097 = vld [vmem:[#allocation2 + $0x10] sm:$0x1f]
    %v1098 = vld [vmem:[#allocation2 + $0x18] sm:$0x1f]
    %v1099 = vld [vmem:[#allocation2 + $0x20] sm:$0x1f]
    %v1100 = vld [vmem:[#allocation2 + $0x28] sm:$0x1f]
    %v1101 = vld [vmem:[#allocation2 + $0x30] sm:$0x1f]
    %v1102 = vld [vmem:[#allocation2 + $0x38] sm:$0x1f]
    %v1103 = vld [vmem:[#allocation2 + $0x40] sm:$0x1f]
    %v1104 = vld [vmem:[#allocation2 + $0x48] sm:$0x1f]
    %v1105 = vld [vmem:[#allocation2 + $0x50] sm:$0x1f]
    %v1106 = vld [vmem:[#allocation2 + $0x58] sm:$0x1f]
    %v1107 = vld [vmem:[#allocation2 + $0x60] sm:$0x1f]
    %v1108 = vld [vmem:[#allocation2 + $0x68] sm:$0x1f]
    %v1109 = vld [vmem:[#allocation2 + $0x70] sm:$0x1f]
    %v1110 = vld [vmem:[#allocation2 + $0x78] sm:$0x1f]
    %v1111 = vld [vmem:[#allocation2 + $0x80] sm:$0x1f]
    %v1112 = vld [vmem:[#allocation2 + $0x88] sm:$0x1f]
    %v1113 = vld [vmem:[#allocation2 + $0x90] sm:$0x1f]
    %v1114 = vld [vmem:[#allocation2 + $0x98] sm:$0x1f]
    %v1115 = vld [vmem:[#allocation2 + $0xa0] sm:$0x1f]
    %v1116 = vld [vmem:[#allocation2 + $0xa8] sm:$0x1f]
    %v1117 = vld [vmem:[#allocation2 + $0xb0] sm:$0x1f]
    %v1118 = vld [vmem:[#allocation2 + $0xb8] sm:$0x1f]
    %v1119 = vld [vmem:[#allocation2 + $0xc0] sm:$0x1f]
    %v1120 = vld [vmem:[#allocation2 + $0xc8] sm:$0x1f]
    %v1121 = vld [vmem:[#allocation2 + $0xd0] sm:$0x1f]
    %v1122 = vld [vmem:[#allocation2 + $0xd8] sm:$0x1f]
    %v1123 = vld [vmem:[#allocation2 + $0xe0] sm:$0x1f]
    %v1124 = vld [vmem:[#allocation2 + $0xe8] sm:$0x1f]
    %v1125 = vunpack.c.l.bf16 %v1095
    %v1126 = vunpack.c.h.bf16 %v1095
    %v1127 = vunpack.c.l.bf16 %v1096
    %v1128 = vunpack.c.h.bf16 %v1096
    %v1129 = vunpack.c.l.bf16 %v1097
    %v1130 = vunpack.c.h.bf16 %v1097
    %v1131 = vunpack.c.l.bf16 %v1098
    %v1132 = vunpack.c.h.bf16 %v1098
    %v1133 = vunpack.c.l.bf16 %v1099
    %v1134 = vunpack.c.h.bf16 %v1099
    %v1135 = vunpack.c.l.bf16 %v1100
    %v1136 = vunpack.c.h.bf16 %v1100
    %v1137 = vunpack.c.l.bf16 %v1101
    %v1138 = vunpack.c.h.bf16 %v1101
    %v1139 = vunpack.c.l.bf16 %v1102
    %v1140 = vunpack.c.h.bf16 %v1102
    %v1141 = vunpack.c.l.bf16 %v1103
    %v1142 = vunpack.c.h.bf16 %v1103
    %v1143 = vunpack.c.l.bf16 %v1104
    %v1144 = vunpack.c.h.bf16 %v1104
    %v1145 = vunpack.c.l.bf16 %v1105
    %v1146 = vunpack.c.h.bf16 %v1105
    %v1147 = vunpack.c.l.bf16 %v1106
    %v1148 = vunpack.c.h.bf16 %v1106
    %v1149 = vunpack.c.l.bf16 %v1107
    %v1150 = vunpack.c.h.bf16 %v1107
    %v1151 = vunpack.c.l.bf16 %v1108
    %v1152 = vunpack.c.h.bf16 %v1108
    %v1153 = vunpack.c.l.bf16 %v1109
    %v1154 = vunpack.c.h.bf16 %v1109
    %v1155 = vunpack.c.l.bf16 %v1110
    %v1156 = vunpack.c.h.bf16 %v1110
    %v1157 = vunpack.c.l.bf16 %v1111
    %v1158 = vunpack.c.h.bf16 %v1111
    %v1159 = vunpack.c.l.bf16 %v1112
    %v1160 = vunpack.c.h.bf16 %v1112
    %v1161 = vunpack.c.l.bf16 %v1113
    %v1162 = vunpack.c.h.bf16 %v1113
    %v1163 = vunpack.c.l.bf16 %v1114
    %v1164 = vunpack.c.h.bf16 %v1114
    %v1165 = vunpack.c.l.bf16 %v1115
    %v1166 = vunpack.c.h.bf16 %v1115
    %v1167 = vunpack.c.l.bf16 %v1116
    %v1168 = vunpack.c.h.bf16 %v1116
    %v1169 = vunpack.c.l.bf16 %v1117
    %v1170 = vunpack.c.h.bf16 %v1117
    %v1171 = vunpack.c.l.bf16 %v1118
    %v1172 = vunpack.c.h.bf16 %v1118
    %v1173 = vunpack.c.l.bf16 %v1119
    %v1174 = vunpack.c.h.bf16 %v1119
    %v1175 = vunpack.c.l.bf16 %v1120
    %v1176 = vunpack.c.h.bf16 %v1120
    %v1177 = vunpack.c.l.bf16 %v1121
    %v1178 = vunpack.c.h.bf16 %v1121
    %v1179 = vunpack.c.l.bf16 %v1122
    %v1180 = vunpack.c.h.bf16 %v1122
    %v1181 = vunpack.c.l.bf16 %v1123
    %v1182 = vunpack.c.h.bf16 %v1123
    %v1183 = vunpack.c.l.bf16 %v1124
    %v1184 = vunpack.c.h.bf16 %v1124
    %v1185 = vlaneseq
    %v1186 = vshrl.u32 %v1185, 7
    %v1187 = vsub.s32 1, %v1186
    %v1188 = vrot.slane %v900, %v1187
    %v1189 = vmul.f32 %v1125, %v1188
    %v1190 = vmul.f32 %v1126, %v1188
    %v1191 = vmul.f32 %v1127, %v1188
    %v1192 = vmul.f32 %v1128, %v1188
    %v1193 = vmul.f32 %v1129, %v1188
    %v1194 = vmul.f32 %v1130, %v1188
    %v1195 = vmul.f32 %v1131, %v1188
    %v1196 = vmul.f32 %v1132, %v1188
    %v1197 = vmul.f32 %v1133, %v1188
    %v1198 = vmul.f32 %v1134, %v1188
    %v1199 = vmul.f32 %v1135, %v1188
    %v1200 = vmul.f32 %v1136, %v1188
    %v1201 = vmul.f32 %v1137, %v1188
    %v1202 = vmul.f32 %v1138, %v1188
    %v1203 = vmul.f32 %v1139, %v1188
    %v1204 = vmul.f32 %v1140, %v1188
    %v1205 = vmul.f32 %v1145, %v1188
    %v1206 = vmul.f32 %v1146, %v1188
    %v1207 = vmul.f32 %v1147, %v1188
    %v1208 = vmul.f32 %v1148, %v1188
    %v1209 = vmul.f32 %v1149, %v1188
    %v1210 = vmul.f32 %v1150, %v1188
    %v1211 = vmul.f32 %v1151, %v1188
    %v1212 = vmul.f32 %v1152, %v1188
    %v1213 = vmul.f32 %v1153, %v1188
    %v1214 = vmul.f32 %v1154, %v1188
    %v1215 = vmul.f32 %v1155, %v1188
    %v1216 = vmul.f32 %v1156, %v1188
    %v1217 = vmul.f32 %v1157, %v1188
    %v1218 = vmul.f32 %v1158, %v1188
    %v1219 = vmul.f32 %v1159, %v1188
    %v1220 = vmul.f32 %v1160, %v1188
    %v1221 = vmul.f32 %v1165, %v1188
    %v1222 = vmul.f32 %v1166, %v1188
    %v1223 = vmul.f32 %v1167, %v1188
    %v1224 = vmul.f32 %v1168, %v1188
    %v1225 = vmul.f32 %v1169, %v1188
    %v1226 = vmul.f32 %v1170, %v1188
    %v1227 = vmul.f32 %v1171, %v1188
    %v1228 = vmul.f32 %v1172, %v1188
    %v1229 = vmul.f32 %v1173, %v1188
    %v1230 = vmul.f32 %v1174, %v1188
    %v1231 = vmul.f32 %v1175, %v1188
    %v1232 = vmul.f32 %v1176, %v1188
    %v1233 = vmul.f32 %v1177, %v1188
    %v1234 = vmul.f32 %v1178, %v1188
    %v1235 = vmul.f32 %v1179, %v1188
    %v1236 = vmul.f32 %v1180, %v1188
    %vm1285 = vcmask 1046528
    %v1286 = vrot.slane %v1189, 1
    %v1287 = vrot.slane %v1190, 1
    %v1288 = vsel %vm1285, %v1286, %v1287
    %v1289 = vrot.slane %v1191, 1
    %v1290 = vrot.slane %v1192, 1
    %v1291 = vsel %vm1285, %v1289, %v1290
    %v1292 = vrot.slane %v1193, 1
    %v1293 = vrot.slane %v1194, 1
    %v1294 = vsel %vm1285, %v1292, %v1293
    %v1295 = vrot.slane %v1195, 1
    %v1296 = vrot.slane %v1196, 1
    %v1297 = vsel %vm1285, %v1295, %v1296
    %v1298 = vrot.slane %v1197, 1
    %v1299 = vrot.slane %v1198, 1
    %v1300 = vsel %vm1285, %v1298, %v1299
    %v1301 = vrot.slane %v1199, 1
    %v1302 = vrot.slane %v1200, 1
    %v1303 = vsel %vm1285, %v1301, %v1302
    %v1304 = vrot.slane %v1201, 1
    %v1305 = vrot.slane %v1202, 1
    %v1306 = vsel %vm1285, %v1304, %v1305
    %v1307 = vrot.slane %v1203, 1
    %v1308 = vrot.slane %v1204, 1
    %v1309 = vsel %vm1285, %v1307, %v1308
    %v1310 = vrot.slane %v1205, 1
    %v1311 = vrot.slane %v1206, 1
    %v1312 = vsel %vm1285, %v1310, %v1311
    %v1313 = vrot.slane %v1207, 1
    %v1314 = vrot.slane %v1208, 1
    %v1315 = vsel %vm1285, %v1313, %v1314
    %v1316 = vrot.slane %v1209, 1
    %v1317 = vrot.slane %v1210, 1
    %v1318 = vsel %vm1285, %v1316, %v1317
    %v1319 = vrot.slane %v1211, 1
    %v1320 = vrot.slane %v1212, 1
    %v1321 = vsel %vm1285, %v1319, %v1320
    %v1322 = vrot.slane %v1213, 1
    %v1323 = vrot.slane %v1214, 1
    %v1324 = vsel %vm1285, %v1322, %v1323
    %v1325 = vrot.slane %v1215, 1
    %v1326 = vrot.slane %v1216, 1
    %v1327 = vsel %vm1285, %v1325, %v1326
    %v1328 = vrot.slane %v1217, 1
    %v1329 = vrot.slane %v1218, 1
    %v1330 = vsel %vm1285, %v1328, %v1329
    %v1331 = vrot.slane %v1219, 1
    %v1332 = vrot.slane %v1220, 1
    %v1333 = vsel %vm1285, %v1331, %v1332
    %v1334 = vrot.slane %v1221, 1
    %v1335 = vrot.slane %v1222, 1
    %v1336 = vsel %vm1285, %v1334, %v1335
    %v1337 = vrot.slane %v1223, 1
    %v1338 = vrot.slane %v1224, 1
    %v1339 = vsel %vm1285, %v1337, %v1338
    %v1340 = vrot.slane %v1225, 1
    %v1341 = vrot.slane %v1226, 1
    %v1342 = vsel %vm1285, %v1340, %v1341
    %v1343 = vrot.slane %v1227, 1
    %v1344 = vrot.slane %v1228, 1
    %v1345 = vsel %vm1285, %v1343, %v1344
    %v1346 = vrot.slane %v1229, 1
    %v1347 = vrot.slane %v1230, 1
    %v1348 = vsel %vm1285, %v1346, %v1347
    %v1349 = vrot.slane %v1231, 1
    %v1350 = vrot.slane %v1232, 1
    %v1351 = vsel %vm1285, %v1349, %v1350
    %v1352 = vrot.slane %v1233, 1
    %v1353 = vrot.slane %v1234, 1
    %v1354 = vsel %vm1285, %v1352, %v1353
    %v1355 = vrot.slane %v1235, 1
    %v1356 = vrot.slane %v1236, 1
    %v1357 = vsel %vm1285, %v1355, %v1356
    %v1382 = vadd.f32 %v1071, %v1288
    %v1383 = vadd.f32 %v1072, %v1291
    %v1384 = vadd.f32 %v1073, %v1294
    %v1385 = vadd.f32 %v1074, %v1297
    %v1386 = vadd.f32 %v1075, %v1300
    %v1387 = vadd.f32 %v1076, %v1303
    %v1388 = vadd.f32 %v1077, %v1306
    %v1389 = vadd.f32 %v1078, %v1309
    %v1390 = vadd.f32 %v1079, %v1312
    %v1391 = vadd.f32 %v1080, %v1315
    %v1392 = vadd.f32 %v1081, %v1318
    %v1393 = vadd.f32 %v1082, %v1321
    %v1394 = vadd.f32 %v1083, %v1324
    %v1395 = vadd.f32 %v1084, %v1327
    %v1396 = vadd.f32 %v1085, %v1330
    %v1397 = vadd.f32 %v1086, %v1333
    %v1398 = vadd.f32 %v1087, %v1336
    %v1399 = vadd.f32 %v1088, %v1339
    %v1400 = vadd.f32 %v1089, %v1342
    %v1401 = vadd.f32 %v1090, %v1345
    %v1402 = vadd.f32 %v1091, %v1348
    %v1403 = vadd.f32 %v1092, %v1351
    %v1404 = vadd.f32 %v1093, %v1354
    %v1405 = vadd.f32 %v1094, %v1357
    %v1406 = vlaneseq
    %v1407 = vshrl.u32 %v1406, 7
    %v1408 = vsub.s32 1, %v1407
    %v1409 = vrot.slane %v901, %v1408
    %v1410 = vmul.f32 %v1127, %v1409
    %v1411 = vmul.f32 %v1128, %v1409
    %v1412 = vmul.f32 %v1129, %v1409
    %v1413 = vmul.f32 %v1130, %v1409
    %v1414 = vmul.f32 %v1131, %v1409
    %v1415 = vmul.f32 %v1132, %v1409
    %v1416 = vmul.f32 %v1133, %v1409
    %v1417 = vmul.f32 %v1134, %v1409
    %v1418 = vmul.f32 %v1135, %v1409
    %v1419 = vmul.f32 %v1136, %v1409
    %v1420 = vmul.f32 %v1137, %v1409
    %v1421 = vmul.f32 %v1138, %v1409
    %v1422 = vmul.f32 %v1139, %v1409
    %v1423 = vmul.f32 %v1140, %v1409
    %v1424 = vmul.f32 %v1141, %v1409
    %v1425 = vmul.f32 %v1142, %v1409
    %v1426 = vmul.f32 %v1147, %v1409
    %v1427 = vmul.f32 %v1148, %v1409
    %v1428 = vmul.f32 %v1149, %v1409
    %v1429 = vmul.f32 %v1150, %v1409
    %v1430 = vmul.f32 %v1151, %v1409
    %v1431 = vmul.f32 %v1152, %v1409
    %v1432 = vmul.f32 %v1153, %v1409
    %v1433 = vmul.f32 %v1154, %v1409
    %v1434 = vmul.f32 %v1155, %v1409
    %v1435 = vmul.f32 %v1156, %v1409
    %v1436 = vmul.f32 %v1157, %v1409
    %v1437 = vmul.f32 %v1158, %v1409
    %v1438 = vmul.f32 %v1159, %v1409
    %v1439 = vmul.f32 %v1160, %v1409
    %v1440 = vmul.f32 %v1161, %v1409
    %v1441 = vmul.f32 %v1162, %v1409
    %v1442 = vmul.f32 %v1167, %v1409
    %v1443 = vmul.f32 %v1168, %v1409
    %v1444 = vmul.f32 %v1169, %v1409
    %v1445 = vmul.f32 %v1170, %v1409
    %v1446 = vmul.f32 %v1171, %v1409
    %v1447 = vmul.f32 %v1172, %v1409
    %v1448 = vmul.f32 %v1173, %v1409
    %v1449 = vmul.f32 %v1174, %v1409
    %v1450 = vmul.f32 %v1175, %v1409
    %v1451 = vmul.f32 %v1176, %v1409
    %v1452 = vmul.f32 %v1177, %v1409
    %v1453 = vmul.f32 %v1178, %v1409
    %v1454 = vmul.f32 %v1179, %v1409
    %v1455 = vmul.f32 %v1180, %v1409
    %v1456 = vmul.f32 %v1181, %v1409
    %v1457 = vmul.f32 %v1182, %v1409
    %v1506 = vrot.slane %v1410, 1
    %v1507 = vrot.slane %v1411, 1
    %v1508 = vsel %vm1285, %v1506, %v1507
    %v1509 = vrot.slane %v1412, 1
    %v1510 = vrot.slane %v1413, 1
    %v1511 = vsel %vm1285, %v1509, %v1510
    %v1512 = vrot.slane %v1414, 1
    %v1513 = vrot.slane %v1415, 1
    %v1514 = vsel %vm1285, %v1512, %v1513
    %v1515 = vrot.slane %v1416, 1
    %v1516 = vrot.slane %v1417, 1
    %v1517 = vsel %vm1285, %v1515, %v1516
    %v1518 = vrot.slane %v1418, 1
    %v1519 = vrot.slane %v1419, 1
    %v1520 = vsel %vm1285, %v1518, %v1519
    %v1521 = vrot.slane %v1420, 1
    %v1522 = vrot.slane %v1421, 1
    %v1523 = vsel %vm1285, %v1521, %v1522
    %v1524 = vrot.slane %v1422, 1
    %v1525 = vrot.slane %v1423, 1
    %v1526 = vsel %vm1285, %v1524, %v1525
    %v1527 = vrot.slane %v1424, 1
    %v1528 = vrot.slane %v1425, 1
    %v1529 = vsel %vm1285, %v1527, %v1528
    %v1530 = vrot.slane %v1426, 1
    %v1531 = vrot.slane %v1427, 1
    %v1532 = vsel %vm1285, %v1530, %v1531
    %v1533 = vrot.slane %v1428, 1
    %v1534 = vrot.slane %v1429, 1
    %v1535 = vsel %vm1285, %v1533, %v1534
    %v1536 = vrot.slane %v1430, 1
    %v1537 = vrot.slane %v1431, 1
    %v1538 = vsel %vm1285, %v1536, %v1537
    %v1539 = vrot.slane %v1432, 1
    %v1540 = vrot.slane %v1433, 1
    %v1541 = vsel %vm1285, %v1539, %v1540
    %v1542 = vrot.slane %v1434, 1
    %v1543 = vrot.slane %v1435, 1
    %v1544 = vsel %vm1285, %v1542, %v1543
    %v1545 = vrot.slane %v1436, 1
    %v1546 = vrot.slane %v1437, 1
    %v1547 = vsel %vm1285, %v1545, %v1546
    %v1548 = vrot.slane %v1438, 1
    %v1549 = vrot.slane %v1439, 1
    %v1550 = vsel %vm1285, %v1548, %v1549
    %v1551 = vrot.slane %v1440, 1
    %v1552 = vrot.slane %v1441, 1
    %v1553 = vsel %vm1285, %v1551, %v1552
    %v1554 = vrot.slane %v1442, 1
    %v1555 = vrot.slane %v1443, 1
    %v1556 = vsel %vm1285, %v1554, %v1555
    %v1557 = vrot.slane %v1444, 1
    %v1558 = vrot.slane %v1445, 1
    %v1559 = vsel %vm1285, %v1557, %v1558
    %v1560 = vrot.slane %v1446, 1
    %v1561 = vrot.slane %v1447, 1
    %v1562 = vsel %vm1285, %v1560, %v1561
    %v1563 = vrot.slane %v1448, 1
    %v1564 = vrot.slane %v1449, 1
    %v1565 = vsel %vm1285, %v1563, %v1564
    %v1566 = vrot.slane %v1450, 1
    %v1567 = vrot.slane %v1451, 1
    %v1568 = vsel %vm1285, %v1566, %v1567
    %v1569 = vrot.slane %v1452, 1
    %v1570 = vrot.slane %v1453, 1
    %v1571 = vsel %vm1285, %v1569, %v1570
    %v1572 = vrot.slane %v1454, 1
    %v1573 = vrot.slane %v1455, 1
    %v1574 = vsel %vm1285, %v1572, %v1573
    %v1575 = vrot.slane %v1456, 1
    %v1576 = vrot.slane %v1457, 1
    %v1577 = vsel %vm1285, %v1575, %v1576
    %v1602 = vadd.f32 %v1382, %v1508
    %v1603 = vadd.f32 %v1383, %v1511
    %v1604 = vadd.f32 %v1384, %v1514
    %v1605 = vadd.f32 %v1385, %v1517
    %v1606 = vadd.f32 %v1386, %v1520
    %v1607 = vadd.f32 %v1387, %v1523
    %v1608 = vadd.f32 %v1388, %v1526
    %v1609 = vadd.f32 %v1389, %v1529
    %v1610 = vadd.f32 %v1390, %v1532
    %v1611 = vadd.f32 %v1391, %v1535
    %v1612 = vadd.f32 %v1392, %v1538
    %v1613 = vadd.f32 %v1393, %v1541
    %v1614 = vadd.f32 %v1394, %v1544
    %v1615 = vadd.f32 %v1395, %v1547
    %v1616 = vadd.f32 %v1396, %v1550
    %v1617 = vadd.f32 %v1397, %v1553
    %v1618 = vadd.f32 %v1398, %v1556
    %v1619 = vadd.f32 %v1399, %v1559
    %v1620 = vadd.f32 %v1400, %v1562
    %v1621 = vadd.f32 %v1401, %v1565
    %v1622 = vadd.f32 %v1402, %v1568
    %v1623 = vadd.f32 %v1403, %v1571
    %v1624 = vadd.f32 %v1404, %v1574
    %v1625 = vadd.f32 %v1405, %v1577
    %v1626 = vlaneseq
    %v1627 = vshrl.u32 %v1626, 7
    %v1628 = vsub.s32 1, %v1627
    %v1629 = vrot.slane %v902, %v1628
    %v1630 = vmul.f32 %v1129, %v1629
    %v1631 = vmul.f32 %v1130, %v1629
    %v1632 = vmul.f32 %v1131, %v1629
    %v1633 = vmul.f32 %v1132, %v1629
    %v1634 = vmul.f32 %v1133, %v1629
    %v1635 = vmul.f32 %v1134, %v1629
    %v1636 = vmul.f32 %v1135, %v1629
    %v1637 = vmul.f32 %v1136, %v1629
    %v1638 = vmul.f32 %v1137, %v1629
    %v1639 = vmul.f32 %v1138, %v1629
    %v1640 = vmul.f32 %v1139, %v1629
    %v1641 = vmul.f32 %v1140, %v1629
    %v1642 = vmul.f32 %v1141, %v1629
    %v1643 = vmul.f32 %v1142, %v1629
    %v1644 = vmul.f32 %v1143, %v1629
    %v1645 = vmul.f32 %v1144, %v1629
    %v1646 = vmul.f32 %v1149, %v1629
    %v1647 = vmul.f32 %v1150, %v1629
    %v1648 = vmul.f32 %v1151, %v1629
    %v1649 = vmul.f32 %v1152, %v1629
    %v1650 = vmul.f32 %v1153, %v1629
    %v1651 = vmul.f32 %v1154, %v1629
    %v1652 = vmul.f32 %v1155, %v1629
    %v1653 = vmul.f32 %v1156, %v1629
    %v1654 = vmul.f32 %v1157, %v1629
    %v1655 = vmul.f32 %v1158, %v1629
    %v1656 = vmul.f32 %v1159, %v1629
    %v1657 = vmul.f32 %v1160, %v1629
    %v1658 = vmul.f32 %v1161, %v1629
    %v1659 = vmul.f32 %v1162, %v1629
    %v1660 = vmul.f32 %v1163, %v1629
    %v1661 = vmul.f32 %v1164, %v1629
    %v1662 = vmul.f32 %v1169, %v1629
    %v1663 = vmul.f32 %v1170, %v1629
    %v1664 = vmul.f32 %v1171, %v1629
    %v1665 = vmul.f32 %v1172, %v1629
    %v1666 = vmul.f32 %v1173, %v1629
    %v1667 = vmul.f32 %v1174, %v1629
    %v1668 = vmul.f32 %v1175, %v1629
    %v1669 = vmul.f32 %v1176, %v1629
    %v1670 = vmul.f32 %v1177, %v1629
    %v1671 = vmul.f32 %v1178, %v1629
    %v1672 = vmul.f32 %v1179, %v1629
    %v1673 = vmul.f32 %v1180, %v1629
    %v1674 = vmul.f32 %v1181, %v1629
    %v1675 = vmul.f32 %v1182, %v1629
    %v1676 = vmul.f32 %v1183, %v1629
    %v1677 = vmul.f32 %v1184, %v1629
    %v1726 = vrot.slane %v1630, 1
    %v1727 = vrot.slane %v1631, 1
    %v1728 = vsel %vm1285, %v1726, %v1727
    %v1729 = vrot.slane %v1632, 1
    %v1730 = vrot.slane %v1633, 1
    %v1731 = vsel %vm1285, %v1729, %v1730
    %v1732 = vrot.slane %v1634, 1
    %v1733 = vrot.slane %v1635, 1
    %v1734 = vsel %vm1285, %v1732, %v1733
    %v1735 = vrot.slane %v1636, 1
    %v1736 = vrot.slane %v1637, 1
    %v1737 = vsel %vm1285, %v1735, %v1736
    %v1738 = vrot.slane %v1638, 1
    %v1739 = vrot.slane %v1639, 1
    %v1740 = vsel %vm1285, %v1738, %v1739
    %v1741 = vrot.slane %v1640, 1
    %v1742 = vrot.slane %v1641, 1
    %v1743 = vsel %vm1285, %v1741, %v1742
    %v1744 = vrot.slane %v1642, 1
    %v1745 = vrot.slane %v1643, 1
    %v1746 = vsel %vm1285, %v1744, %v1745
    %v1747 = vrot.slane %v1644, 1
    %v1748 = vrot.slane %v1645, 1
    %v1749 = vsel %vm1285, %v1747, %v1748
    %v1750 = vrot.slane %v1646, 1
    %v1751 = vrot.slane %v1647, 1
    %v1752 = vsel %vm1285, %v1750, %v1751
    %v1753 = vrot.slane %v1648, 1
    %v1754 = vrot.slane %v1649, 1
    %v1755 = vsel %vm1285, %v1753, %v1754
    %v1756 = vrot.slane %v1650, 1
    %v1757 = vrot.slane %v1651, 1
    %v1758 = vsel %vm1285, %v1756, %v1757
    %v1759 = vrot.slane %v1652, 1
    %v1760 = vrot.slane %v1653, 1
    %v1761 = vsel %vm1285, %v1759, %v1760
    %v1762 = vrot.slane %v1654, 1
    %v1763 = vrot.slane %v1655, 1
    %v1764 = vsel %vm1285, %v1762, %v1763
    %v1765 = vrot.slane %v1656, 1
    %v1766 = vrot.slane %v1657, 1
    %v1767 = vsel %vm1285, %v1765, %v1766
    %v1768 = vrot.slane %v1658, 1
    %v1769 = vrot.slane %v1659, 1
    %v1770 = vsel %vm1285, %v1768, %v1769
    %v1771 = vrot.slane %v1660, 1
    %v1772 = vrot.slane %v1661, 1
    %v1773 = vsel %vm1285, %v1771, %v1772
    %v1774 = vrot.slane %v1662, 1
    %v1775 = vrot.slane %v1663, 1
    %v1776 = vsel %vm1285, %v1774, %v1775
    %v1777 = vrot.slane %v1664, 1
    %v1778 = vrot.slane %v1665, 1
    %v1779 = vsel %vm1285, %v1777, %v1778
    %v1780 = vrot.slane %v1666, 1
    %v1781 = vrot.slane %v1667, 1
    %v1782 = vsel %vm1285, %v1780, %v1781
    %v1783 = vrot.slane %v1668, 1
    %v1784 = vrot.slane %v1669, 1
    %v1785 = vsel %vm1285, %v1783, %v1784
    %v1786 = vrot.slane %v1670, 1
    %v1787 = vrot.slane %v1671, 1
    %v1788 = vsel %vm1285, %v1786, %v1787
    %v1789 = vrot.slane %v1672, 1
    %v1790 = vrot.slane %v1673, 1
    %v1791 = vsel %vm1285, %v1789, %v1790
    %v1792 = vrot.slane %v1674, 1
    %v1793 = vrot.slane %v1675, 1
    %v1794 = vsel %vm1285, %v1792, %v1793
    %v1795 = vrot.slane %v1676, 1
    %v1796 = vrot.slane %v1677, 1
    %v1797 = vsel %vm1285, %v1795, %v1796
    %v1822 = vadd.f32 %v1602, %v1728
    %v1823 = vadd.f32 %v1603, %v1731
    %v1824 = vadd.f32 %v1604, %v1734
    %v1825 = vadd.f32 %v1605, %v1737
    %v1826 = vadd.f32 %v1606, %v1740
    %v1827 = vadd.f32 %v1607, %v1743
    %v1828 = vadd.f32 %v1608, %v1746
    %v1829 = vadd.f32 %v1609, %v1749
    %v1830 = vadd.f32 %v1610, %v1752
    %v1831 = vadd.f32 %v1611, %v1755
    %v1832 = vadd.f32 %v1612, %v1758
    %v1833 = vadd.f32 %v1613, %v1761
    %v1834 = vadd.f32 %v1614, %v1764
    %v1835 = vadd.f32 %v1615, %v1767
    %v1836 = vadd.f32 %v1616, %v1770
    %v1837 = vadd.f32 %v1617, %v1773
    %v1838 = vadd.f32 %v1618, %v1776
    %v1839 = vadd.f32 %v1619, %v1779
    %v1840 = vadd.f32 %v1620, %v1782
    %v1841 = vadd.f32 %v1621, %v1785
    %v1842 = vadd.f32 %v1622, %v1788
    %v1843 = vadd.f32 %v1623, %v1791
    %v1844 = vadd.f32 %v1624, %v1794
    %v1845 = vadd.f32 %v1625, %v1797
    %v1846 = vld [vmem:[#allocation2] sm:$0x1e]
    %v1847 = vld [vmem:[#allocation2 + $0x8] sm:$0x1e]
    %v1848 = vld [vmem:[#allocation2 + $0x10] sm:$0x1e]
    %v1849 = vld [vmem:[#allocation2 + $0x18] sm:$0x1e]
    %v1850 = vld [vmem:[#allocation2 + $0x20] sm:$0x1e]
    %v1851 = vld [vmem:[#allocation2 + $0x28] sm:$0x1e]
    %v1852 = vld [vmem:[#allocation2 + $0x30] sm:$0x1e]
    %v1853 = vld [vmem:[#allocation2 + $0x38] sm:$0x1e]
    %v1854 = vld [vmem:[#allocation2 + $0x40] sm:$0x1e]
    %v1855 = vld [vmem:[#allocation2 + $0x48] sm:$0x1e]
    %v1856 = vld [vmem:[#allocation2 + $0x50] sm:$0x1e]
    %v1857 = vld [vmem:[#allocation2 + $0x58] sm:$0x1e]
    %v1858 = vld [vmem:[#allocation2 + $0x60] sm:$0x1e]
    %v1859 = vld [vmem:[#allocation2 + $0x68] sm:$0x1e]
    %v1860 = vld [vmem:[#allocation2 + $0x70] sm:$0x1e]
    %v1861 = vld [vmem:[#allocation2 + $0x78] sm:$0x1e]
    %v1862 = vld [vmem:[#allocation2 + $0x80] sm:$0x1e]
    %v1863 = vld [vmem:[#allocation2 + $0x88] sm:$0x1e]
    %v1864 = vld [vmem:[#allocation2 + $0x90] sm:$0x1e]
    %v1865 = vld [vmem:[#allocation2 + $0x98] sm:$0x1e]
    %v1866 = vld [vmem:[#allocation2 + $0xa0] sm:$0x1e]
    %v1867 = vld [vmem:[#allocation2 + $0xa8] sm:$0x1e]
    %v1868 = vld [vmem:[#allocation2 + $0xb0] sm:$0x1e]
    %v1869 = vld [vmem:[#allocation2 + $0xb8] sm:$0x1e]
    %v1870 = vld [vmem:[#allocation2 + $0xc0] sm:$0x1e]
    %v1871 = vld [vmem:[#allocation2 + $0xc8] sm:$0x1e]
    %v1872 = vld [vmem:[#allocation2 + $0xd0] sm:$0x1e]
    %v1873 = vld [vmem:[#allocation2 + $0xd8] sm:$0x1e]
    %v1874 = vld [vmem:[#allocation2 + $0xe0] sm:$0x1e]
    %v1875 = vld [vmem:[#allocation2 + $0xe8] sm:$0x1e]
    %v1876 = vunpack.c.l.bf16 %v1846
    %v1877 = vunpack.c.h.bf16 %v1846
    %v1878 = vunpack.c.l.bf16 %v1847
    %v1879 = vunpack.c.h.bf16 %v1847
    %v1880 = vunpack.c.l.bf16 %v1848
    %v1881 = vunpack.c.h.bf16 %v1848
    %v1882 = vunpack.c.l.bf16 %v1849
    %v1883 = vunpack.c.h.bf16 %v1849
    %v1884 = vunpack.c.l.bf16 %v1850
    %v1885 = vunpack.c.h.bf16 %v1850
    %v1886 = vunpack.c.l.bf16 %v1851
    %v1887 = vunpack.c.h.bf16 %v1851
    %v1888 = vunpack.c.l.bf16 %v1852
    %v1889 = vunpack.c.h.bf16 %v1852
    %v1890 = vunpack.c.l.bf16 %v1853
    %v1891 = vunpack.c.h.bf16 %v1853
    %v1892 = vunpack.c.l.bf16 %v1854
    %v1893 = vunpack.c.h.bf16 %v1854
    %v1894 = vunpack.c.l.bf16 %v1855
    %v1895 = vunpack.c.h.bf16 %v1855
    %v1896 = vunpack.c.l.bf16 %v1856
    %v1897 = vunpack.c.h.bf16 %v1856
    %v1898 = vunpack.c.l.bf16 %v1857
    %v1899 = vunpack.c.h.bf16 %v1857
    %v1900 = vunpack.c.l.bf16 %v1858
    %v1901 = vunpack.c.h.bf16 %v1858
    %v1902 = vunpack.c.l.bf16 %v1859
    %v1903 = vunpack.c.h.bf16 %v1859
    %v1904 = vunpack.c.l.bf16 %v1860
    %v1905 = vunpack.c.h.bf16 %v1860
    %v1906 = vunpack.c.l.bf16 %v1861
    %v1907 = vunpack.c.h.bf16 %v1861
    %v1908 = vunpack.c.l.bf16 %v1862
    %v1909 = vunpack.c.h.bf16 %v1862
    %v1910 = vunpack.c.l.bf16 %v1863
    %v1911 = vunpack.c.h.bf16 %v1863
    %v1912 = vunpack.c.l.bf16 %v1864
    %v1913 = vunpack.c.h.bf16 %v1864
    %v1914 = vunpack.c.l.bf16 %v1865
    %v1915 = vunpack.c.h.bf16 %v1865
    %v1916 = vunpack.c.l.bf16 %v1866
    %v1917 = vunpack.c.h.bf16 %v1866
    %v1918 = vunpack.c.l.bf16 %v1867
    %v1919 = vunpack.c.h.bf16 %v1867
    %v1920 = vunpack.c.l.bf16 %v1868
    %v1921 = vunpack.c.h.bf16 %v1868
    %v1922 = vunpack.c.l.bf16 %v1869
    %v1923 = vunpack.c.h.bf16 %v1869
    %v1924 = vunpack.c.l.bf16 %v1870
    %v1925 = vunpack.c.h.bf16 %v1870
    %v1926 = vunpack.c.l.bf16 %v1871
    %v1927 = vunpack.c.h.bf16 %v1871
    %v1928 = vunpack.c.l.bf16 %v1872
    %v1929 = vunpack.c.h.bf16 %v1872
    %v1930 = vunpack.c.l.bf16 %v1873
    %v1931 = vunpack.c.h.bf16 %v1873
    %v1932 = vunpack.c.l.bf16 %v1874
    %v1933 = vunpack.c.h.bf16 %v1874
    %v1934 = vunpack.c.l.bf16 %v1875
    %v1935 = vunpack.c.h.bf16 %v1875
    %v1936 = vlaneseq
    %v1937 = vshrl.u32 %v1936, 7
    %v1938 = vsub.s32 2, %v1937
    %v1939 = vrot.slane %v900, %v1938
    %v1940 = vmul.f32 %v1876, %v1939
    %v1941 = vmul.f32 %v1877, %v1939
    %v1942 = vmul.f32 %v1878, %v1939
    %v1943 = vmul.f32 %v1879, %v1939
    %v1944 = vmul.f32 %v1880, %v1939
    %v1945 = vmul.f32 %v1881, %v1939
    %v1946 = vmul.f32 %v1882, %v1939
    %v1947 = vmul.f32 %v1883, %v1939
    %v1948 = vmul.f32 %v1884, %v1939
    %v1949 = vmul.f32 %v1885, %v1939
    %v1950 = vmul.f32 %v1886, %v1939
    %v1951 = vmul.f32 %v1887, %v1939
    %v1952 = vmul.f32 %v1888, %v1939
    %v1953 = vmul.f32 %v1889, %v1939
    %v1954 = vmul.f32 %v1890, %v1939
    %v1955 = vmul.f32 %v1891, %v1939
    %v1956 = vmul.f32 %v1896, %v1939
    %v1957 = vmul.f32 %v1897, %v1939
    %v1958 = vmul.f32 %v1898, %v1939
    %v1959 = vmul.f32 %v1899, %v1939
    %v1960 = vmul.f32 %v1900, %v1939
    %v1961 = vmul.f32 %v1901, %v1939
    %v1962 = vmul.f32 %v1902, %v1939
    %v1963 = vmul.f32 %v1903, %v1939
    %v1964 = vmul.f32 %v1904, %v1939
    %v1965 = vmul.f32 %v1905, %v1939
    %v1966 = vmul.f32 %v1906, %v1939
    %v1967 = vmul.f32 %v1907, %v1939
    %v1968 = vmul.f32 %v1908, %v1939
    %v1969 = vmul.f32 %v1909, %v1939
    %v1970 = vmul.f32 %v1910, %v1939
    %v1971 = vmul.f32 %v1911, %v1939
    %v1972 = vmul.f32 %v1916, %v1939
    %v1973 = vmul.f32 %v1917, %v1939
    %v1974 = vmul.f32 %v1918, %v1939
    %v1975 = vmul.f32 %v1919, %v1939
    %v1976 = vmul.f32 %v1920, %v1939
    %v1977 = vmul.f32 %v1921, %v1939
    %v1978 = vmul.f32 %v1922, %v1939
    %v1979 = vmul.f32 %v1923, %v1939
    %v1980 = vmul.f32 %v1924, %v1939
    %v1981 = vmul.f32 %v1925, %v1939
    %v1982 = vmul.f32 %v1926, %v1939
    %v1983 = vmul.f32 %v1927, %v1939
    %v1984 = vmul.f32 %v1928, %v1939
    %v1985 = vmul.f32 %v1929, %v1939
    %v1986 = vmul.f32 %v1930, %v1939
    %v1987 = vmul.f32 %v1931, %v1939
    %vm2036 = vcmask 1045504
    %v2037 = vrot.slane %v1940, 2
    %v2038 = vrot.slane %v1941, 2
    %v2039 = vsel %vm2036, %v2037, %v2038
    %v2040 = vrot.slane %v1942, 2
    %v2041 = vrot.slane %v1943, 2
    %v2042 = vsel %vm2036, %v2040, %v2041
    %v2043 = vrot.slane %v1944, 2
    %v2044 = vrot.slane %v1945, 2
    %v2045 = vsel %vm2036, %v2043, %v2044
    %v2046 = vrot.slane %v1946, 2
    %v2047 = vrot.slane %v1947, 2
    %v2048 = vsel %vm2036, %v2046, %v2047
    %v2049 = vrot.slane %v1948, 2
    %v2050 = vrot.slane %v1949, 2
    %v2051 = vsel %vm2036, %v2049, %v2050
    %v2052 = vrot.slane %v1950, 2
    %v2053 = vrot.slane %v1951, 2
    %v2054 = vsel %vm2036, %v2052, %v2053
    %v2055 = vrot.slane %v1952, 2
    %v2056 = vrot.slane %v1953, 2
    %v2057 = vsel %vm2036, %v2055, %v2056
    %v2058 = vrot.slane %v1954, 2
    %v2059 = vrot.slane %v1955, 2
    %v2060 = vsel %vm2036, %v2058, %v2059
    %v2061 = vrot.slane %v1956, 2
    %v2062 = vrot.slane %v1957, 2
    %v2063 = vsel %vm2036, %v2061, %v2062
    %v2064 = vrot.slane %v1958, 2
    %v2065 = vrot.slane %v1959, 2
    %v2066 = vsel %vm2036, %v2064, %v2065
    %v2067 = vrot.slane %v1960, 2
    %v2068 = vrot.slane %v1961, 2
    %v2069 = vsel %vm2036, %v2067, %v2068
    %v2070 = vrot.slane %v1962, 2
    %v2071 = vrot.slane %v1963, 2
    %v2072 = vsel %vm2036, %v2070, %v2071
    %v2073 = vrot.slane %v1964, 2
    %v2074 = vrot.slane %v1965, 2
    %v2075 = vsel %vm2036, %v2073, %v2074
    %v2076 = vrot.slane %v1966, 2
    %v2077 = vrot.slane %v1967, 2
    %v2078 = vsel %vm2036, %v2076, %v2077
    %v2079 = vrot.slane %v1968, 2
    %v2080 = vrot.slane %v1969, 2
    %v2081 = vsel %vm2036, %v2079, %v2080
    %v2082 = vrot.slane %v1970, 2
    %v2083 = vrot.slane %v1971, 2
    %v2084 = vsel %vm2036, %v2082, %v2083
    %v2085 = vrot.slane %v1972, 2
    %v2086 = vrot.slane %v1973, 2
    %v2087 = vsel %vm2036, %v2085, %v2086
    %v2088 = vrot.slane %v1974, 2
    %v2089 = vrot.slane %v1975, 2
    %v2090 = vsel %vm2036, %v2088, %v2089
    %v2091 = vrot.slane %v1976, 2
    %v2092 = vrot.slane %v1977, 2
    %v2093 = vsel %vm2036, %v2091, %v2092
    %v2094 = vrot.slane %v1978, 2
    %v2095 = vrot.slane %v1979, 2
    %v2096 = vsel %vm2036, %v2094, %v2095
    %v2097 = vrot.slane %v1980, 2
    %v2098 = vrot.slane %v1981, 2
    %v2099 = vsel %vm2036, %v2097, %v2098
    %v2100 = vrot.slane %v1982, 2
    %v2101 = vrot.slane %v1983, 2
    %v2102 = vsel %vm2036, %v2100, %v2101
    %v2103 = vrot.slane %v1984, 2
    %v2104 = vrot.slane %v1985, 2
    %v2105 = vsel %vm2036, %v2103, %v2104
    %v2106 = vrot.slane %v1986, 2
    %v2107 = vrot.slane %v1987, 2
    %v2108 = vsel %vm2036, %v2106, %v2107
    %v2133 = vadd.f32 %v1822, %v2039
    %v2134 = vadd.f32 %v1823, %v2042
    %v2135 = vadd.f32 %v1824, %v2045
    %v2136 = vadd.f32 %v1825, %v2048
    %v2137 = vadd.f32 %v1826, %v2051
    %v2138 = vadd.f32 %v1827, %v2054
    %v2139 = vadd.f32 %v1828, %v2057
    %v2140 = vadd.f32 %v1829, %v2060
    %v2141 = vadd.f32 %v1830, %v2063
    %v2142 = vadd.f32 %v1831, %v2066
    %v2143 = vadd.f32 %v1832, %v2069
    %v2144 = vadd.f32 %v1833, %v2072
    %v2145 = vadd.f32 %v1834, %v2075
    %v2146 = vadd.f32 %v1835, %v2078
    %v2147 = vadd.f32 %v1836, %v2081
    %v2148 = vadd.f32 %v1837, %v2084
    %v2149 = vadd.f32 %v1838, %v2087
    %v2150 = vadd.f32 %v1839, %v2090
    %v2151 = vadd.f32 %v1840, %v2093
    %v2152 = vadd.f32 %v1841, %v2096
    %v2153 = vadd.f32 %v1842, %v2099
    %v2154 = vadd.f32 %v1843, %v2102
    %v2155 = vadd.f32 %v1844, %v2105
    %v2156 = vadd.f32 %v1845, %v2108
    %v2157 = vlaneseq
    %v2158 = vshrl.u32 %v2157, 7
    %v2159 = vsub.s32 2, %v2158
    %v2160 = vrot.slane %v901, %v2159
    %v2161 = vmul.f32 %v1878, %v2160
    %v2162 = vmul.f32 %v1879, %v2160
    %v2163 = vmul.f32 %v1880, %v2160
    %v2164 = vmul.f32 %v1881, %v2160
    %v2165 = vmul.f32 %v1882, %v2160
    %v2166 = vmul.f32 %v1883, %v2160
    %v2167 = vmul.f32 %v1884, %v2160
    %v2168 = vmul.f32 %v1885, %v2160
    %v2169 = vmul.f32 %v1886, %v2160
    %v2170 = vmul.f32 %v1887, %v2160
    %v2171 = vmul.f32 %v1888, %v2160
    %v2172 = vmul.f32 %v1889, %v2160
    %v2173 = vmul.f32 %v1890, %v2160
    %v2174 = vmul.f32 %v1891, %v2160
    %v2175 = vmul.f32 %v1892, %v2160
    %v2176 = vmul.f32 %v1893, %v2160
    %v2177 = vmul.f32 %v1898, %v2160
    %v2178 = vmul.f32 %v1899, %v2160
    %v2179 = vmul.f32 %v1900, %v2160
    %v2180 = vmul.f32 %v1901, %v2160
    %v2181 = vmul.f32 %v1902, %v2160
    %v2182 = vmul.f32 %v1903, %v2160
    %v2183 = vmul.f32 %v1904, %v2160
    %v2184 = vmul.f32 %v1905, %v2160
    %v2185 = vmul.f32 %v1906, %v2160
    %v2186 = vmul.f32 %v1907, %v2160
    %v2187 = vmul.f32 %v1908, %v2160
    %v2188 = vmul.f32 %v1909, %v2160
    %v2189 = vmul.f32 %v1910, %v2160
    %v2190 = vmul.f32 %v1911, %v2160
    %v2191 = vmul.f32 %v1912, %v2160
    %v2192 = vmul.f32 %v1913, %v2160
    %v2193 = vmul.f32 %v1918, %v2160
    %v2194 = vmul.f32 %v1919, %v2160
    %v2195 = vmul.f32 %v1920, %v2160
    %v2196 = vmul.f32 %v1921, %v2160
    %v2197 = vmul.f32 %v1922, %v2160
    %v2198 = vmul.f32 %v1923, %v2160
    %v2199 = vmul.f32 %v1924, %v2160
    %v2200 = vmul.f32 %v1925, %v2160
    %v2201 = vmul.f32 %v1926, %v2160
    %v2202 = vmul.f32 %v1927, %v2160
    %v2203 = vmul.f32 %v1928, %v2160
    %v2204 = vmul.f32 %v1929, %v2160
    %v2205 = vmul.f32 %v1930, %v2160
    %v2206 = vmul.f32 %v1931, %v2160
    %v2207 = vmul.f32 %v1932, %v2160
    %v2208 = vmul.f32 %v1933, %v2160
    %v2257 = vrot.slane %v2161, 2
    %v2258 = vrot.slane %v2162, 2
    %v2259 = vsel %vm2036, %v2257, %v2258
    %v2260 = vrot.slane %v2163, 2
    %v2261 = vrot.slane %v2164, 2
    %v2262 = vsel %vm2036, %v2260, %v2261
    %v2263 = vrot.slane %v2165, 2
    %v2264 = vrot.slane %v2166, 2
    %v2265 = vsel %vm2036, %v2263, %v2264
    %v2266 = vrot.slane %v2167, 2
    %v2267 = vrot.slane %v2168, 2
    %v2268 = vsel %vm2036, %v2266, %v2267
    %v2269 = vrot.slane %v2169, 2
    %v2270 = vrot.slane %v2170, 2
    %v2271 = vsel %vm2036, %v2269, %v2270
    %v2272 = vrot.slane %v2171, 2
    %v2273 = vrot.slane %v2172, 2
    %v2274 = vsel %vm2036, %v2272, %v2273
    %v2275 = vrot.slane %v2173, 2
    %v2276 = vrot.slane %v2174, 2
    %v2277 = vsel %vm2036, %v2275, %v2276
    %v2278 = vrot.slane %v2175, 2
    %v2279 = vrot.slane %v2176, 2
    %v2280 = vsel %vm2036, %v2278, %v2279
    %v2281 = vrot.slane %v2177, 2
    %v2282 = vrot.slane %v2178, 2
    %v2283 = vsel %vm2036, %v2281, %v2282
    %v2284 = vrot.slane %v2179, 2
    %v2285 = vrot.slane %v2180, 2
    %v2286 = vsel %vm2036, %v2284, %v2285
    %v2287 = vrot.slane %v2181, 2
    %v2288 = vrot.slane %v2182, 2
    %v2289 = vsel %vm2036, %v2287, %v2288
    %v2290 = vrot.slane %v2183, 2
    %v2291 = vrot.slane %v2184, 2
    %v2292 = vsel %vm2036, %v2290, %v2291
    %v2293 = vrot.slane %v2185, 2
    %v2294 = vrot.slane %v2186, 2
    %v2295 = vsel %vm2036, %v2293, %v2294
    %v2296 = vrot.slane %v2187, 2
    %v2297 = vrot.slane %v2188, 2
    %v2298 = vsel %vm2036, %v2296, %v2297
    %v2299 = vrot.slane %v2189, 2
    %v2300 = vrot.slane %v2190, 2
    %v2301 = vsel %vm2036, %v2299, %v2300
    %v2302 = vrot.slane %v2191, 2
    %v2303 = vrot.slane %v2192, 2
    %v2304 = vsel %vm2036, %v2302, %v2303
    %v2305 = vrot.slane %v2193, 2
    %v2306 = vrot.slane %v2194, 2
    %v2307 = vsel %vm2036, %v2305, %v2306
    %v2308 = vrot.slane %v2195, 2
    %v2309 = vrot.slane %v2196, 2
    %v2310 = vsel %vm2036, %v2308, %v2309
    %v2311 = vrot.slane %v2197, 2
    %v2312 = vrot.slane %v2198, 2
    %v2313 = vsel %vm2036, %v2311, %v2312
    %v2314 = vrot.slane %v2199, 2
    %v2315 = vrot.slane %v2200, 2
    %v2316 = vsel %vm2036, %v2314, %v2315
    %v2317 = vrot.slane %v2201, 2
    %v2318 = vrot.slane %v2202, 2
    %v2319 = vsel %vm2036, %v2317, %v2318
    %v2320 = vrot.slane %v2203, 2
    %v2321 = vrot.slane %v2204, 2
    %v2322 = vsel %vm2036, %v2320, %v2321
    %v2323 = vrot.slane %v2205, 2
    %v2324 = vrot.slane %v2206, 2
    %v2325 = vsel %vm2036, %v2323, %v2324
    %v2326 = vrot.slane %v2207, 2
    %v2327 = vrot.slane %v2208, 2
    %v2328 = vsel %vm2036, %v2326, %v2327
    %v2353 = vadd.f32 %v2133, %v2259
    %v2354 = vadd.f32 %v2134, %v2262
    %v2355 = vadd.f32 %v2135, %v2265
    %v2356 = vadd.f32 %v2136, %v2268
    %v2357 = vadd.f32 %v2137, %v2271
    %v2358 = vadd.f32 %v2138, %v2274
    %v2359 = vadd.f32 %v2139, %v2277
    %v2360 = vadd.f32 %v2140, %v2280
    %v2361 = vadd.f32 %v2141, %v2283
    %v2362 = vadd.f32 %v2142, %v2286
    %v2363 = vadd.f32 %v2143, %v2289
    %v2364 = vadd.f32 %v2144, %v2292
    %v2365 = vadd.f32 %v2145, %v2295
    %v2366 = vadd.f32 %v2146, %v2298
    %v2367 = vadd.f32 %v2147, %v2301
    %v2368 = vadd.f32 %v2148, %v2304
    %v2369 = vadd.f32 %v2149, %v2307
    %v2370 = vadd.f32 %v2150, %v2310
    %v2371 = vadd.f32 %v2151, %v2313
    %v2372 = vadd.f32 %v2152, %v2316
    %v2373 = vadd.f32 %v2153, %v2319
    %v2374 = vadd.f32 %v2154, %v2322
    %v2375 = vadd.f32 %v2155, %v2325
    %v2376 = vadd.f32 %v2156, %v2328
    %v2377 = vlaneseq
    %v2378 = vshrl.u32 %v2377, 7
    %v2379 = vsub.s32 2, %v2378
    %v2380 = vrot.slane %v902, %v2379
    %v2381 = vmul.f32 %v1880, %v2380
    %v2382 = vmul.f32 %v1881, %v2380
    %v2383 = vmul.f32 %v1882, %v2380
    %v2384 = vmul.f32 %v1883, %v2380
    %v2385 = vmul.f32 %v1884, %v2380
    %v2386 = vmul.f32 %v1885, %v2380
    %v2387 = vmul.f32 %v1886, %v2380
    %v2388 = vmul.f32 %v1887, %v2380
    %v2389 = vmul.f32 %v1888, %v2380
    %v2390 = vmul.f32 %v1889, %v2380
    %v2391 = vmul.f32 %v1890, %v2380
    %v2392 = vmul.f32 %v1891, %v2380
    %v2393 = vmul.f32 %v1892, %v2380
    %v2394 = vmul.f32 %v1893, %v2380
    %v2395 = vmul.f32 %v1894, %v2380
    %v2396 = vmul.f32 %v1895, %v2380
    %v2397 = vmul.f32 %v1900, %v2380
    %v2398 = vmul.f32 %v1901, %v2380
    %v2399 = vmul.f32 %v1902, %v2380
    %v2400 = vmul.f32 %v1903, %v2380
    %v2401 = vmul.f32 %v1904, %v2380
    %v2402 = vmul.f32 %v1905, %v2380
    %v2403 = vmul.f32 %v1906, %v2380
    %v2404 = vmul.f32 %v1907, %v2380
    %v2405 = vmul.f32 %v1908, %v2380
    %v2406 = vmul.f32 %v1909, %v2380
    %v2407 = vmul.f32 %v1910, %v2380
    %v2408 = vmul.f32 %v1911, %v2380
    %v2409 = vmul.f32 %v1912, %v2380
    %v2410 = vmul.f32 %v1913, %v2380
    %v2411 = vmul.f32 %v1914, %v2380
    %v2412 = vmul.f32 %v1915, %v2380
    %v2413 = vmul.f32 %v1920, %v2380
    %v2414 = vmul.f32 %v1921, %v2380
    %v2415 = vmul.f32 %v1922, %v2380
    %v2416 = vmul.f32 %v1923, %v2380
    %v2417 = vmul.f32 %v1924, %v2380
    %v2418 = vmul.f32 %v1925, %v2380
    %v2419 = vmul.f32 %v1926, %v2380
    %v2420 = vmul.f32 %v1927, %v2380
    %v2421 = vmul.f32 %v1928, %v2380
    %v2422 = vmul.f32 %v1929, %v2380
    %v2423 = vmul.f32 %v1930, %v2380
    %v2424 = vmul.f32 %v1931, %v2380
    %v2425 = vmul.f32 %v1932, %v2380
    %v2426 = vmul.f32 %v1933, %v2380
    %v2427 = vmul.f32 %v1934, %v2380
    %v2428 = vmul.f32 %v1935, %v2380
    %v2477 = vrot.slane %v2381, 2
    %v2478 = vrot.slane %v2382, 2
    %v2479 = vsel %vm2036, %v2477, %v2478
    %v2480 = vrot.slane %v2383, 2
    %v2481 = vrot.slane %v2384, 2
    %v2482 = vsel %vm2036, %v2480, %v2481
    %v2483 = vrot.slane %v2385, 2
    %v2484 = vrot.slane %v2386, 2
    %v2485 = vsel %vm2036, %v2483, %v2484
    %v2486 = vrot.slane %v2387, 2
    %v2487 = vrot.slane %v2388, 2
    %v2488 = vsel %vm2036, %v2486, %v2487
    %v2489 = vrot.slane %v2389, 2
    %v2490 = vrot.slane %v2390, 2
    %v2491 = vsel %vm2036, %v2489, %v2490
    %v2492 = vrot.slane %v2391, 2
    %v2493 = vrot.slane %v2392, 2
    %v2494 = vsel %vm2036, %v2492, %v2493
    %v2495 = vrot.slane %v2393, 2
    %v2496 = vrot.slane %v2394, 2
    %v2497 = vsel %vm2036, %v2495, %v2496
    %v2498 = vrot.slane %v2395, 2
    %v2499 = vrot.slane %v2396, 2
    %v2500 = vsel %vm2036, %v2498, %v2499
    %v2501 = vrot.slane %v2397, 2
    %v2502 = vrot.slane %v2398, 2
    %v2503 = vsel %vm2036, %v2501, %v2502
    %v2504 = vrot.slane %v2399, 2
    %v2505 = vrot.slane %v2400, 2
    %v2506 = vsel %vm2036, %v2504, %v2505
    %v2507 = vrot.slane %v2401, 2
    %v2508 = vrot.slane %v2402, 2
    %v2509 = vsel %vm2036, %v2507, %v2508
    %v2510 = vrot.slane %v2403, 2
    %v2511 = vrot.slane %v2404, 2
    %v2512 = vsel %vm2036, %v2510, %v2511
    %v2513 = vrot.slane %v2405, 2
    %v2514 = vrot.slane %v2406, 2
    %v2515 = vsel %vm2036, %v2513, %v2514
    %v2516 = vrot.slane %v2407, 2
    %v2517 = vrot.slane %v2408, 2
    %v2518 = vsel %vm2036, %v2516, %v2517
    %v2519 = vrot.slane %v2409, 2
    %v2520 = vrot.slane %v2410, 2
    %v2521 = vsel %vm2036, %v2519, %v2520
    %v2522 = vrot.slane %v2411, 2
    %v2523 = vrot.slane %v2412, 2
    %v2524 = vsel %vm2036, %v2522, %v2523
    %v2525 = vrot.slane %v2413, 2
    %v2526 = vrot.slane %v2414, 2
    %v2527 = vsel %vm2036, %v2525, %v2526
    %v2528 = vrot.slane %v2415, 2
    %v2529 = vrot.slane %v2416, 2
    %v2530 = vsel %vm2036, %v2528, %v2529
    %v2531 = vrot.slane %v2417, 2
    %v2532 = vrot.slane %v2418, 2
    %v2533 = vsel %vm2036, %v2531, %v2532
    %v2534 = vrot.slane %v2419, 2
    %v2535 = vrot.slane %v2420, 2
    %v2536 = vsel %vm2036, %v2534, %v2535
    %v2537 = vrot.slane %v2421, 2
    %v2538 = vrot.slane %v2422, 2
    %v2539 = vsel %vm2036, %v2537, %v2538
    %v2540 = vrot.slane %v2423, 2
    %v2541 = vrot.slane %v2424, 2
    %v2542 = vsel %vm2036, %v2540, %v2541
    %v2543 = vrot.slane %v2425, 2
    %v2544 = vrot.slane %v2426, 2
    %v2545 = vsel %vm2036, %v2543, %v2544
    %v2546 = vrot.slane %v2427, 2
    %v2547 = vrot.slane %v2428, 2
    %v2548 = vsel %vm2036, %v2546, %v2547
    %v2573 = vadd.f32 %v2353, %v2479
    %v2574 = vadd.f32 %v2354, %v2482
    %v2575 = vadd.f32 %v2355, %v2485
    %v2576 = vadd.f32 %v2356, %v2488
    %v2577 = vadd.f32 %v2357, %v2491
    %v2578 = vadd.f32 %v2358, %v2494
    %v2579 = vadd.f32 %v2359, %v2497
    %v2580 = vadd.f32 %v2360, %v2500
    %v2581 = vadd.f32 %v2361, %v2503
    %v2582 = vadd.f32 %v2362, %v2506
    %v2583 = vadd.f32 %v2363, %v2509
    %v2584 = vadd.f32 %v2364, %v2512
    %v2585 = vadd.f32 %v2365, %v2515
    %v2586 = vadd.f32 %v2366, %v2518
    %v2587 = vadd.f32 %v2367, %v2521
    %v2588 = vadd.f32 %v2368, %v2524
    %v2589 = vadd.f32 %v2369, %v2527
    %v2590 = vadd.f32 %v2370, %v2530
    %v2591 = vadd.f32 %v2371, %v2533
    %v2592 = vadd.f32 %v2372, %v2536
    %v2593 = vadd.f32 %v2373, %v2539
    %v2594 = vadd.f32 %v2374, %v2542
    %v2595 = vadd.f32 %v2375, %v2545
    %v2596 = vadd.f32 %v2376, %v2548
    %v2597 = vld [vmem:[%s4] sm:$0x1]
    %v2599 = vlaneseq
    %v2600 = vshrl.u32 %v2599, 7
    %v2601 = vsub.s32 0, %v2600
    %v2602 = vrot.slane %v2597, %v2601
    %v2604 = vadd.f32 %v2573, %v2602
    %v2605 = vadd.f32 %v2574, %v2602
    %v2606 = vadd.f32 %v2575, %v2602
    %v2607 = vadd.f32 %v2576, %v2602
    %v2608 = vadd.f32 %v2577, %v2602
    %v2609 = vadd.f32 %v2578, %v2602
    %v2610 = vadd.f32 %v2579, %v2602
    %v2611 = vadd.f32 %v2580, %v2602
    %v2612 = vadd.f32 %v2581, %v2602
    %v2613 = vadd.f32 %v2582, %v2602
    %v2614 = vadd.f32 %v2583, %v2602
    %v2615 = vadd.f32 %v2584, %v2602
    %v2616 = vadd.f32 %v2585, %v2602
    %v2617 = vadd.f32 %v2586, %v2602
    %v2618 = vadd.f32 %v2587, %v2602
    %v2619 = vadd.f32 %v2588, %v2602
    %v2620 = vadd.f32 %v2589, %v2602
    %v2621 = vadd.f32 %v2590, %v2602
    %v2622 = vadd.f32 %v2591, %v2602
    %v2623 = vadd.f32 %v2592, %v2602
    %v2624 = vadd.f32 %v2593, %v2602
    %v2625 = vadd.f32 %v2594, %v2602
    %v2626 = vadd.f32 %v2595, %v2602
    %v2627 = vadd.f32 %v2596, %v2602
    %v2628 = vmax.f32 %v2604, 0.0
    %v2629 = vmax.f32 %v2605, 0.0
    %v2630 = vmax.f32 %v2606, 0.0
    %v2631 = vmax.f32 %v2607, 0.0
    %v2632 = vmax.f32 %v2608, 0.0
    %v2633 = vmax.f32 %v2609, 0.0
    %v2634 = vmax.f32 %v2610, 0.0
    %v2635 = vmax.f32 %v2611, 0.0
    %v2636 = vmax.f32 %v2612, 0.0
    %v2637 = vmax.f32 %v2613, 0.0
    %v2638 = vmax.f32 %v2614, 0.0
    %v2639 = vmax.f32 %v2615, 0.0
    %v2640 = vmax.f32 %v2616, 0.0
    %v2641 = vmax.f32 %v2617, 0.0
    %v2642 = vmax.f32 %v2618, 0.0
    %v2643 = vmax.f32 %v2619, 0.0
    %v2644 = vmax.f32 %v2620, 0.0
    %v2645 = vmax.f32 %v2621, 0.0
    %v2646 = vmax.f32 %v2622, 0.0
    %v2647 = vmax.f32 %v2623, 0.0
    %v2648 = vmax.f32 %v2624, 0.0
    %v2649 = vmax.f32 %v2625, 0.0
    %v2650 = vmax.f32 %v2626, 0.0
    %v2651 = vmax.f32 %v2627, 0.0
    %v2652 = vmin.f32 %v2628, 6.0
    %v2653 = vmin.f32 %v2629, 6.0
    %v2654 = vmin.f32 %v2630, 6.0
    %v2655 = vmin.f32 %v2631, 6.0
    %v2656 = vmin.f32 %v2632, 6.0
    %v2657 = vmin.f32 %v2633, 6.0
    %v2658 = vmin.f32 %v2634, 6.0
    %v2659 = vmin.f32 %v2635, 6.0
    %v2660 = vmin.f32 %v2636, 6.0
    %v2661 = vmin.f32 %v2637, 6.0
    %v2662 = vmin.f32 %v2638, 6.0
    %v2663 = vmin.f32 %v2639, 6.0
    %v2664 = vmin.f32 %v2640, 6.0
    %v2665 = vmin.f32 %v2641, 6.0
    %v2666 = vmin.f32 %v2642, 6.0
    %v2667 = vmin.f32 %v2643, 6.0
    %v2668 = vmin.f32 %v2644, 6.0
    %v2669 = vmin.f32 %v2645, 6.0
    %v2670 = vmin.f32 %v2646, 6.0
    %v2671 = vmin.f32 %v2647, 6.0
    %v2672 = vmin.f32 %v2648, 6.0
    %v2673 = vmin.f32 %v2649, 6.0
    %v2674 = vmin.f32 %v2650, 6.0
    %v2675 = vmin.f32 %v2651, 6.0
    %v2676 = vpack.c.bf16 %v2652, %v2652
    %v2677 = vpack.c.bf16 %v2653, %v2653
    %v2678 = vpack.c.bf16 %v2654, %v2654
    %v2679 = vpack.c.bf16 %v2655, %v2655
    %v2680 = vpack.c.bf16 %v2656, %v2656
    %v2681 = vpack.c.bf16 %v2657, %v2657
    %v2682 = vpack.c.bf16 %v2658, %v2658
    %v2683 = vpack.c.bf16 %v2659, %v2659
    %v2684 = vpack.c.bf16 %v2660, %v2660
    %v2685 = vpack.c.bf16 %v2661, %v2661
    %v2686 = vpack.c.bf16 %v2662, %v2662
    %v2687 = vpack.c.bf16 %v2663, %v2663
    %v2688 = vpack.c.bf16 %v2664, %v2664
    %v2689 = vpack.c.bf16 %v2665, %v2665
    %v2690 = vpack.c.bf16 %v2666, %v2666
    %v2691 = vpack.c.bf16 %v2667, %v2667
    %v2692 = vpack.c.bf16 %v2668, %v2668
    %v2693 = vpack.c.bf16 %v2669, %v2669
    %v2694 = vpack.c.bf16 %v2670, %v2670
    %v2695 = vpack.c.bf16 %v2671, %v2671
    %v2696 = vpack.c.bf16 %v2672, %v2672
    %v2697 = vpack.c.bf16 %v2673, %v2673
    %v2698 = vpack.c.bf16 %v2674, %v2674
    %v2699 = vpack.c.bf16 %v2675, %v2675
    %v2700 = vld [vmem:[#allocation9] sm:$0xf]
    %v2701 = vld [vmem:[#allocation9 + $0x4] sm:$0xf]
    %v2702 = vld [vmem:[#allocation9 + $0x8] sm:$0xf]
    %v2703 = vld [vmem:[#allocation9 + $0xc] sm:$0xf]
    %v2704 = vld [vmem:[#allocation9 + $0x10] sm:$0xf]
    %v2705 = vld [vmem:[#allocation9 + $0x14] sm:$0xf]
    %v2706 = vld [vmem:[#allocation9 + $0x18] sm:$0xf]
    %v2707 = vld [vmem:[#allocation9 + $0x1c] sm:$0xf]
    %v2708 = vld [vmem:[#allocation9 + $0x20] sm:$0xf]
    %v2709 = vld [vmem:[#allocation9 + $0x24] sm:$0xf]
    %v2710 = vld [vmem:[#allocation9 + $0x28] sm:$0xf]
    %v2711 = vld [vmem:[#allocation9 + $0x2c] sm:$0xf]
    %v2712 = vld [vmem:[#allocation9 + $0x30] sm:$0xf]
    %v2713 = vld [vmem:[#allocation9 + $0x34] sm:$0xf]
    %v2714 = vld [vmem:[#allocation9 + $0x38] sm:$0xf]
    %v2715 = vld [vmem:[#allocation9 + $0x3c] sm:$0xf]
    %v2716 = vld [vmem:[%s6] sm:$0x1]
    %v2718 = vlaneseq
    %v2719 = vshrl.u32 %v2718, 7
    %v2720 = vsub.s32 0, %v2719
    %v2721 = vrot.slane %v2716, %v2720
    %v2747 = vunpack.c.l.b16 %v2676
    %v2748 = vunpack.c.l.b16 %v2677
    %v2749 = vunpack.c.l.b16 %v2678
    %v2750 = vunpack.c.l.b16 %v2679
    %v2751 = vunpack.c.l.b16 %v2680
    %v2752 = vunpack.c.l.b16 %v2681
    %v2753 = vunpack.c.l.b16 %v2682
    %v2754 = vunpack.c.l.b16 %v2683
    %v2755 = vunpack.c.l.b16 %v2684
    %v2756 = vunpack.c.l.b16 %v2685
    %v2757 = vunpack.c.l.b16 %v2686
    %v2758 = vunpack.c.l.b16 %v2687
    %v2759 = vunpack.c.l.b16 %v2688
    %v2760 = vunpack.c.l.b16 %v2689
    %v2761 = vunpack.c.l.b16 %v2690
    %v2762 = vunpack.c.l.b16 %v2691
    %v2763 = vunpack.c.l.b16 %v2692
    %v2764 = vunpack.c.l.b16 %v2693
    %v2765 = vunpack.c.l.b16 %v2694
    %v2766 = vunpack.c.l.b16 %v2695
    %v2767 = vunpack.c.l.b16 %v2696
    %v2768 = vunpack.c.l.b16 %v2697
    %v2769 = vunpack.c.l.b16 %v2698
    %v2770 = vunpack.c.l.b16 %v2699
    %v2771 = vpack.c.b16 %v2748, %v2747
    %v2772 = vpack.c.b16 %v2750, %v2749
    %v2773 = vpack.c.b16 %v2752, %v2751
    %v2774 = vpack.c.b16 %v2754, %v2753
    %v2775 = vpack.c.b16 %v2756, %v2755
    %v2776 = vpack.c.b16 %v2758, %v2757
    %v2777 = vpack.c.b16 %v2760, %v2759
    %v2778 = vpack.c.b16 %v2762, %v2761
    %v2779 = vpack.c.b16 %v2764, %v2763
    %v2780 = vpack.c.b16 %v2766, %v2765
    %v2781 = vpack.c.b16 %v2768, %v2767
    %v2782 = vpack.c.b16 %v2770, %v2769
    %v2811 = vunpack.c.l.b16 %v2700
    %v2812 = vunpack.c.l.b16 %v2701
    %v2813 = vunpack.c.l.b16 %v2702
    %v2814 = vunpack.c.l.b16 %v2703
    %v2815 = vunpack.c.l.b16 %v2704
    %v2816 = vunpack.c.l.b16 %v2705
    %v2817 = vunpack.c.l.b16 %v2706
    %v2818 = vunpack.c.l.b16 %v2707
    %v2819 = vunpack.c.l.b16 %v2708
    %v2820 = vunpack.c.l.b16 %v2709
    %v2821 = vunpack.c.l.b16 %v2710
    %v2822 = vunpack.c.l.b16 %v2711
    %v2823 = vunpack.c.l.b16 %v2712
    %v2824 = vunpack.c.l.b16 %v2713
    %v2825 = vunpack.c.l.b16 %v2714
    %v2826 = vunpack.c.l.b16 %v2715
    %v2827 = vpack.c.b16 %v2812, %v2811
    %v2828 = vpack.c.b16 %v2814, %v2813
    %v2829 = vpack.c.b16 %v2816, %v2815
    %v2830 = vpack.c.b16 %v2818, %v2817
    %v2831 = vpack.c.b16 %v2820, %v2819
    %v2832 = vpack.c.b16 %v2822, %v2821
    %v2833 = vpack.c.b16 %v2824, %v2823
    %v2834 = vpack.c.b16 %v2826, %v2825
    %2843 = vmatprep.subr.bf16.mxu0 0
    %2844 = vmatpush1.bf16.msra.mxu0 %v2827
    %2845 = vmatprep.subr.bf16.mxu0 0
    %2846 = vmatpush1.bf16.msra.mxu0 %v2828
    %2847 = vmatprep.subr.bf16.mxu0 0
    %2848 = vmatpush1.bf16.msra.mxu0 %v2829
    %2849 = vmatprep.subr.bf16.mxu0 0
    %2850 = vmatpush1.bf16.msra.mxu0 %v2830
    %2851 = vmatprep.subr.bf16.mxu0 0
    %2852 = vmatpush1.bf16.msra.mxu0 %v2831
    %2853 = vmatprep.subr.bf16.mxu0 0
    %2854 = vmatpush1.bf16.msra.mxu0 %v2832
    %2855 = vmatprep.subr.bf16.mxu0 0
    %2856 = vmatpush1.bf16.msra.mxu0 %v2833
    %2857 = vmatprep.subr.bf16.mxu0 0
    %2858 = vmatpush1.bf16.msra.mxu0 %v2834
    %2859 = vmatprep.subr.bf16.mxu0 0
    %2860 = vmatpush1.bf16.msra.mxu0 0
    %2861 = vmatprep.subr.bf16.mxu0 0
    %2862 = vmatpush1.bf16.msra.mxu0 0
    %2863 = vmatprep.subr.bf16.mxu0 0
    %2864 = vmatpush1.bf16.msra.mxu0 0
    %2865 = vmatprep.subr.bf16.mxu0 0
    %2866 = vmatpush1.bf16.msra.mxu0 0
    %2867 = vmatprep.subr.bf16.mxu0 0
    %2868 = vmatpush1.bf16.msra.mxu0 0
    %2869 = vmatprep.subr.bf16.mxu0 0
    %2870 = vmatpush1.bf16.msra.mxu0 0
    %2871 = vmatprep.subr.bf16.mxu0 0
    %2872 = vmatpush1.bf16.msra.mxu0 0
    %2873 = vmatprep.subr.bf16.mxu0 0
    %2874 = vmatpush1.bf16.msra.mxu0 0
    %2875 = vmatprep.mubr.bf16.mxu0 0
    %2876 = vmatmul.mubr.bf16.gmra.mrb[0].mxu0 %v2771
    %v2877 = vpop.f32.mrb[0].mxu0
    %v2878 = vadd.f32 %v2721, %v2877
    %v2879 = vpop.f32.mrb[0].mxu0
    %v2880 = vpop.f32.mrb[0].mxu0
    %v2881 = vadd.f32 %v2721, %v2880
    %v2882 = vpop.f32.mrb[0].mxu0
    %2883 = vmatprep.mubr.bf16.mxu0 0
    %2884 = vmatmul.mubr.bf16.gmra.mrb[0].mxu0 %v2772
    %v2885 = vpop.f32.mrb[0].mxu0
    %v2886 = vadd.f32 %v2721, %v2885
    %v2887 = vpop.f32.mrb[0].mxu0
    %v2888 = vpop.f32.mrb[0].mxu0
    %v2889 = vadd.f32 %v2721, %v2888
    %v2890 = vpop.f32.mrb[0].mxu0
    %2891 = vmatprep.mubr.bf16.mxu0 0
    %2892 = vmatmul.mubr.bf16.gmra.mrb[0].mxu0 %v2773
    %v2893 = vpop.f32.mrb[0].mxu0
    %v2894 = vadd.f32 %v2721, %v2893
    %v2895 = vpop.f32.mrb[0].mxu0
    %v2896 = vpop.f32.mrb[0].mxu0
    %v2897 = vadd.f32 %v2721, %v2896
    %v2898 = vpop.f32.mrb[0].mxu0
    %2899 = vmatprep.mubr.bf16.mxu0 0
    %2900 = vmatmul.mubr.bf16.gmra.mrb[0].mxu0 %v2774
    %v2901 = vpop.f32.mrb[0].mxu0
    %v2902 = vadd.f32 %v2721, %v2901
    %v2903 = vpop.f32.mrb[0].mxu0
    %v2904 = vpop.f32.mrb[0].mxu0
    %v2905 = vadd.f32 %v2721, %v2904
    %v2906 = vpop.f32.mrb[0].mxu0
    %2907 = vmatprep.mubr.bf16.mxu0 0
    %2908 = vmatmul.mubr.bf16.gmra.mrb[0].mxu0 %v2775
    %v2909 = vpop.f32.mrb[0].mxu0
    %v2910 = vadd.f32 %v2721, %v2909
    %v2911 = vpop.f32.mrb[0].mxu0
    %v2912 = vpop.f32.mrb[0].mxu0
    %v2913 = vadd.f32 %v2721, %v2912
    %v2914 = vpop.f32.mrb[0].mxu0
    %2915 = vmatprep.mubr.bf16.mxu0 0
    %2916 = vmatmul.mubr.bf16.gmra.mrb[0].mxu0 %v2776
    %v2917 = vpop.f32.mrb[0].mxu0
    %v2918 = vadd.f32 %v2721, %v2917
    %v2919 = vpop.f32.mrb[0].mxu0
    %v2920 = vpop.f32.mrb[0].mxu0
    %v2921 = vadd.f32 %v2721, %v2920
    %v2922 = vpop.f32.mrb[0].mxu0
    %2923 = vmatprep.mubr.bf16.mxu0 0
    %2924 = vmatmul.mubr.bf16.gmra.mrb[0].mxu0 %v2777
    %v2925 = vpop.f32.mrb[0].mxu0
    %v2926 = vadd.f32 %v2721, %v2925
    %v2927 = vpop.f32.mrb[0].mxu0
    %v2928 = vpop.f32.mrb[0].mxu0
    %v2929 = vadd.f32 %v2721, %v2928
    %v2930 = vpop.f32.mrb[0].mxu0
    %2931 = vmatprep.mubr.bf16.mxu0 0
    %2932 = vmatmul.mubr.bf16.gmra.mrb[0].mxu0 %v2778
    %v2933 = vpop.f32.mrb[0].mxu0
    %v2934 = vadd.f32 %v2721, %v2933
    %v2935 = vpop.f32.mrb[0].mxu0
    %v2936 = vpop.f32.mrb[0].mxu0
    %v2937 = vadd.f32 %v2721, %v2936
    %v2938 = vpop.f32.mrb[0].mxu0
    %2939 = vmatprep.mubr.bf16.mxu0 0
    %2940 = vmatmul.mubr.bf16.gmra.mrb[0].mxu0 %v2779
    %v2941 = vpop.f32.mrb[0].mxu0
    %v2942 = vadd.f32 %v2721, %v2941
    %v2943 = vpop.f32.mrb[0].mxu0
    %v2944 = vpop.f32.mrb[0].mxu0
    %v2945 = vadd.f32 %v2721, %v2944
    %v2946 = vpop.f32.mrb[0].mxu0
    %2947 = vmatprep.mubr.bf16.mxu0 0
    %2948 = vmatmul.mubr.bf16.gmra.mrb[0].mxu0 %v2780
    %v2949 = vpop.f32.mrb[0].mxu0
    %v2950 = vadd.f32 %v2721, %v2949
    %v2951 = vpop.f32.mrb[0].mxu0
    %v2952 = vpop.f32.mrb[0].mxu0
    %v2953 = vadd.f32 %v2721, %v2952
    %v2954 = vpop.f32.mrb[0].mxu0
    %2955 = vmatprep.mubr.bf16.mxu0 0
    %2956 = vmatmul.mubr.bf16.gmra.mrb[0].mxu0 %v2781
    %v2957 = vpop.f32.mrb[0].mxu0
    %v2958 = vadd.f32 %v2721, %v2957
    %v2959 = vpop.f32.mrb[0].mxu0
    %v2960 = vpop.f32.mrb[0].mxu0
    %v2961 = vadd.f32 %v2721, %v2960
    %v2962 = vpop.f32.mrb[0].mxu0
    %2963 = vmatprep.mubr.bf16.mxu0 0
    %2964 = vmatmul.mubr.bf16.gmra.mrb[0].mxu0 %v2782
    %v2965 = vpop.f32.mrb[0].mxu0
    %v2966 = vadd.f32 %v2721, %v2965
    %v2967 = vpop.f32.mrb[0].mxu0
    %v2968 = vpop.f32.mrb[0].mxu0
    %v2969 = vadd.f32 %v2721, %v2968
    %v2970 = vpop.f32.mrb[0].mxu0
    %2971 = vdwg.mxu0
    %v2972 = vld [vmem:[#allocation3] sm:$0xff]
    %v2973 = vld [vmem:[#allocation3 + $0x8] sm:$0xff]
    %v2974 = vld [vmem:[#allocation3 + $0x10] sm:$0xff]
    %v2975 = vld [vmem:[#allocation3 + $0x18] sm:$0xff]
    %v2976 = vld [vmem:[#allocation3 + $0x20] sm:$0xff]
    %v2977 = vld [vmem:[#allocation3 + $0x28] sm:$0xff]
    %v2978 = vld [vmem:[#allocation3 + $0x30] sm:$0xff]
    %v2979 = vld [vmem:[#allocation3 + $0x38] sm:$0xff]
    %v2980 = vld [vmem:[#allocation3 + $0x40] sm:$0xff]
    %v2981 = vld [vmem:[#allocation3 + $0x48] sm:$0xff]
    %v2982 = vld [vmem:[#allocation3 + $0x50] sm:$0xff]
    %v2983 = vld [vmem:[#allocation3 + $0x58] sm:$0xff]
    %v2984 = vld [vmem:[#allocation3 + $0x60] sm:$0xff]
    %v2985 = vld [vmem:[#allocation3 + $0x68] sm:$0xff]
    %v2986 = vld [vmem:[#allocation3 + $0x70] sm:$0xff]
    %v2987 = vld [vmem:[#allocation3 + $0x78] sm:$0xff]
    %v2988 = vld [vmem:[#allocation3 + $0x80] sm:$0xff]
    %v2989 = vld [vmem:[#allocation3 + $0x88] sm:$0xff]
    %v2990 = vld [vmem:[#allocation3 + $0x90] sm:$0xff]
    %v2991 = vld [vmem:[#allocation3 + $0x98] sm:$0xff]
    %v2992 = vld [vmem:[#allocation3 + $0xa0] sm:$0xff]
    %v2993 = vld [vmem:[#allocation3 + $0xa8] sm:$0xff]
    %v2994 = vld [vmem:[#allocation3 + $0xb0] sm:$0xff]
    %v2995 = vld [vmem:[#allocation3 + $0xb8] sm:$0xff]
    %v2996 = vadd.f32 %v2878, %v2972
    %v2997 = vadd.f32 %v2881, %v2973
    %v2998 = vadd.f32 %v2886, %v2974
    %v2999 = vadd.f32 %v2889, %v2975
    %v3000 = vadd.f32 %v2894, %v2976
    %v3001 = vadd.f32 %v2897, %v2977
    %v3002 = vadd.f32 %v2902, %v2978
    %v3003 = vadd.f32 %v2905, %v2979
    %v3004 = vadd.f32 %v2910, %v2980
    %v3005 = vadd.f32 %v2913, %v2981
    %v3006 = vadd.f32 %v2918, %v2982
    %v3007 = vadd.f32 %v2921, %v2983
    %v3008 = vadd.f32 %v2926, %v2984
    %v3009 = vadd.f32 %v2929, %v2985
    %v3010 = vadd.f32 %v2934, %v2986
    %v3011 = vadd.f32 %v2937, %v2987
    %v3012 = vadd.f32 %v2942, %v2988
    %v3013 = vadd.f32 %v2945, %v2989
    %v3014 = vadd.f32 %v2950, %v2990
    %v3015 = vadd.f32 %v2953, %v2991
    %v3016 = vadd.f32 %v2958, %v2992
    %v3017 = vadd.f32 %v2961, %v2993
    %v3018 = vadd.f32 %v2966, %v2994
    %v3019 = vadd.f32 %v2969, %v2995
    %3020 = vst.msk [vmem:[#allocation11] sm:$0xff] %vm197, %v2996
    %3021 = vst.msk [vmem:[#allocation11 + $0x8] sm:$0xff] %vm197, %v2997
    %3022 = vst.msk [vmem:[#allocation11 + $0x10] sm:$0xff] %vm197, %v2998
    %3023 = vst.msk [vmem:[#allocation11 + $0x18] sm:$0xff] %vm197, %v2999
    %3024 = vst.msk [vmem:[#allocation11 + $0x20] sm:$0xff] %vm197, %v3000
    %3025 = vst.msk [vmem:[#allocation11 + $0x28] sm:$0xff] %vm197, %v3001
    %3026 = vst.msk [vmem:[#allocation11 + $0x30] sm:$0xff] %vm197, %v3002
    %3027 = vst.msk [vmem:[#allocation11 + $0x38] sm:$0xff] %vm197, %v3003
    %3028 = vst.msk [vmem:[#allocation11 + $0x40] sm:$0xff] %vm197, %v3004
    %3029 = vst.msk [vmem:[#allocation11 + $0x48] sm:$0xff] %vm197, %v3005
    %3030 = vst.msk [vmem:[#allocation11 + $0x50] sm:$0xff] %vm197, %v3006
    %3031 = vst.msk [vmem:[#allocation11 + $0x58] sm:$0xff] %vm197, %v3007
    %3032 = vst.msk [vmem:[#allocation11 + $0x60] sm:$0xff] %vm197, %v3008
    %3033 = vst.msk [vmem:[#allocation11 + $0x68] sm:$0xff] %vm197, %v3009
    %3034 = vst.msk [vmem:[#allocation11 + $0x70] sm:$0xff] %vm197, %v3010
    %3035 = vst.msk [vmem:[#allocation11 + $0x78] sm:$0xff] %vm197, %v3011
    %3036 = vst.msk [vmem:[#allocation11 + $0x80] sm:$0xff] %vm197, %v3012
    %3037 = vst.msk [vmem:[#allocation11 + $0x88] sm:$0xff] %vm197, %v3013
    %3038 = vst.msk [vmem:[#allocation11 + $0x90] sm:$0xff] %vm197, %v3014
    %3039 = vst.msk [vmem:[#allocation11 + $0x98] sm:$0xff] %vm197, %v3015
    %3040 = vst.msk [vmem:[#allocation11 + $0xa0] sm:$0xff] %vm197, %v3016
    %3041 = vst.msk [vmem:[#allocation11 + $0xa8] sm:$0xff] %vm197, %v3017
    %3042 = vst.msk [vmem:[#allocation11 + $0xb0] sm:$0xff] %vm197, %v3018
    %3043 = vst.msk [vmem:[#allocation11 + $0xb8] sm:$0xff] %vm197, %v3019
    %vm3044 = vcmask 1047616
    %3045 = vst.msk [vmem:[#allocation11] sm:$0xff] %vm3044, %v2878
    %3046 = vst.msk [vmem:[#allocation11 + $0x8] sm:$0xff] %vm3044, %v2881
    %3047 = vst.msk [vmem:[#allocation11 + $0x10] sm:$0xff] %vm3044, %v2886
    %3048 = vst.msk [vmem:[#allocation11 + $0x18] sm:$0xff] %vm3044, %v2889
    %3049 = vst.msk [vmem:[#allocation11 + $0x20] sm:$0xff] %vm3044, %v2894
    %3050 = vst.msk [vmem:[#allocation11 + $0x28] sm:$0xff] %vm3044, %v2897
    %3051 = vst.msk [vmem:[#allocation11 + $0x30] sm:$0xff] %vm3044, %v2902
    %3052 = vst.msk [vmem:[#allocation11 + $0x38] sm:$0xff] %vm3044, %v2905
    %3053 = vst.msk [vmem:[#allocation11 + $0x40] sm:$0xff] %vm3044, %v2910
    %3054 = vst.msk [vmem:[#allocation11 + $0x48] sm:$0xff] %vm3044, %v2913
    %3055 = vst.msk [vmem:[#allocation11 + $0x50] sm:$0xff] %vm3044, %v2918
    %3056 = vst.msk [vmem:[#allocation11 + $0x58] sm:$0xff] %vm3044, %v2921
    %3057 = vst.msk [vmem:[#allocation11 + $0x60] sm:$0xff] %vm3044, %v2926
    %3058 = vst.msk [vmem:[#allocation11 + $0x68] sm:$0xff] %vm3044, %v2929
    %3059 = vst.msk [vmem:[#allocation11 + $0x70] sm:$0xff] %vm3044, %v2934
    %3060 = vst.msk [vmem:[#allocation11 + $0x78] sm:$0xff] %vm3044, %v2937
    %3061 = vst.msk [vmem:[#allocation11 + $0x80] sm:$0xff] %vm3044, %v2942
    %3062 = vst.msk [vmem:[#allocation11 + $0x88] sm:$0xff] %vm3044, %v2945
    %3063 = vst.msk [vmem:[#allocation11 + $0x90] sm:$0xff] %vm3044, %v2950
    %3064 = vst.msk [vmem:[#allocation11 + $0x98] sm:$0xff] %vm3044, %v2953
    %3065 = vst.msk [vmem:[#allocation11 + $0xa0] sm:$0xff] %vm3044, %v2958
    %3066 = vst.msk [vmem:[#allocation11 + $0xa8] sm:$0xff] %vm3044, %v2961
    %3067 = vst.msk [vmem:[#allocation11 + $0xb0] sm:$0xff] %vm3044, %v2966
    %3068 = vst.msk [vmem:[#allocation11 + $0xb8] sm:$0xff] %vm3044, %v2969
    // Predicated region
    $region46: #{tpu_custom_call.1} parent=1 // pred_check
      _
    $region47: #{tpu_custom_call.1} parent=1 // pred_check_branch
      %3070 = sbr.rel (0) target = $region49
    $region48: #{tpu_custom_call.1} parent=1 // pred_region
      %s3072 = ssub.s32 3072, 3072
      %3073 = vsyncadd [#allocation5], %s3072
      %s3074 = sshll.u32 [#allocation11], 4
      %s3075 = int_to_ptr.vmem [resolvable:$true] %s3074
      %3080 = dma.vmem_to_hbm [thread:$0]  %s3075, 3072, %s7, [#allocation5], 128, 128, 8
    $region49: #{tpu_custom_call.1} parent=1 // pred_fallthru
      _
    // Predicated region
    $region50: #{tpu_custom_call.1} parent=1 // pred_check
      _
    $region51: #{tpu_custom_call.1} parent=1 // pred_check_branch
      %3082 = sbr.rel (0) target = $region53
    $region52: #{tpu_custom_call.1} parent=1 // pred_region
      %3083 = dma.done [#allocation5], 3072
    $region53: #{tpu_custom_call.1} parent=1 // pred_fallthru
      _
    %3084 = vsyncpa [#allocation4], 1
    %3085 = vsyncpa [#allocation7], 1
    %3086 = vsyncpa [#allocation10], 1
    %3087 = vsyncpa [#allocation5], 1

</llo_original>
